<compile_context>
chip_gen: v6e
topology: v6e:2x2x1
jax: 0.10.0
libtpu: 0.0.40
codegen_flags: <defaults>
</compile_context>

<pallas_src>
import functools
import math

import jax
import jax.numpy as jnp
from jax.experimental import pallas as pl
from jax.experimental.pallas import tpu as pltpu

NEG_SLOPE = 0.01   # torch.nn.LeakyReLU default
OUT_PAD = 128      # lane-dense readout width (readout weight zero-padded)


def _leaky_relu(x):
    return jnp.where(x >= 0, x, NEG_SLOPE * x)


# ----------------------------------------------------------------------------
# Pallas kernel: one GROUP of G graphs per grid step.
#   x_ref    : (1, G*N, F)      node features of the group's graphs (f32)
#   adj_ref  : (1, G*N, G*N)    block-diagonal adjacency, adj[dst, src] (bf16)
#   weights  : constant-index VMEM residents (shared across all graphs)
#   o_ref    : (1, G, 128)      lane 0 of row j = critic value of graph j
# ----------------------------------------------------------------------------
def _gcn_group_kernel(x_ref, adj_ref, w_ri_ref, b_ri_ref, w_taps_ref,
                      b_taps_ref, w_ro_ref, b_ro_ref, o_ref, *,
                      n_layers, n_taps, graphs_per_group, n_nodes):
    gn = graphs_per_group * n_nodes
    x = x_ref[0]                               # (GN, F)   f32
    A = adj_ref[0].astype(jnp.float32)         # (GN, GN)  exact small ints

    # --- readin MLP (num_layers=1, plain_last=False): Linear + leaky_relu ---
    h = jnp.dot(x, w_ri_ref[...], preferred_element_type=jnp.float32)
    h = _leaky_relu(h + b_ri_ref[...])         # (GN, C)

    # --- residual RES+ blocks: h <- h + GraphFilter(leaky_relu(h)) ---
    # GraphFilter:  z = sum_k  (S^k y) @ W_k   (+ per-tap biases, pre-summed)
    for layer in range(n_layers):
        y = _leaky_relu(h)
        z = jnp.dot(y, w_taps_ref[layer, 0],
                    preferred_element_type=jnp.float32) + b_taps_ref[layer]
        cur = y
        for k in range(1, n_taps + 1):
            # block-diagonal adjacency -> one full-height MXU pass shifts all
            # G graphs at once
            cur = jnp.dot(A, cur, preferred_element_type=jnp.float32)
            z = z + jnp.dot(cur, w_taps_ref[layer, k],
                            preferred_element_type=jnp.float32)
        h = h + z

    # --- per-graph node-mean pooling as a (G, GN) matmul, then readout ---
    # pool[j, i] = 1/N if node i belongs to graph j (i.e. j*N <= i < (j+1)*N)
    row = jax.lax.broadcasted_iota(jnp.int32, (graphs_per_group, gn), 0)
    col = jax.lax.broadcasted_iota(jnp.int32, (graphs_per_group, gn), 1)
    in_graph = (col >= row * n_nodes) & (col < (row + 1) * n_nodes)
    pool = jnp.where(in_graph, jnp.float32(1.0 / n_nodes), jnp.float32(0.0))
    pooled = jnp.dot(pool, h, preferred_element_type=jnp.float32)   # (G, C)
    # readout is a single Linear (plain_last=True); weight zero-padded to 128
    # output lanes so the store is a full-width unmasked vst.
    out = jnp.dot(pooled, w_ro_ref[...],
                  preferred_element_type=jnp.float32) + b_ro_ref[...]  # (G, 128)
    o_ref[0] = out.astype(o_ref.dtype)


def _const_spec(arr):
    """Full-array block with a constant index map -> DMA'd once, stays resident."""
    nd = arr.ndim
    return pl.BlockSpec(arr.shape, lambda g, _nd=nd: (0,) * _nd)


def gcn_critic_pallas(x_groups, adj_groups, kparams, *, n_layers, n_taps,
                      graphs_per_group, n_nodes):
    num_groups, gn, f_in = x_groups.shape
    kernel = functools.partial(
        _gcn_group_kernel, n_layers=n_layers, n_taps=n_taps,
        graphs_per_group=graphs_per_group, n_nodes=n_nodes)
    return pl.pallas_call(
        kernel,
        out_shape=jax.ShapeDtypeStruct(
            (num_groups, graphs_per_group, OUT_PAD), jnp.float32),
        grid=(num_groups,),
        in_specs=[
            pl.BlockSpec((1, gn, f_in), lambda g: (g, 0, 0)),   # x (no F pad)
            pl.BlockSpec((1, gn, gn), lambda g: (g, 0, 0)),     # block-diag adj
            _const_spec(kparams["w_ri"]),
            _const_spec(kparams["b_ri"]),
            _const_spec(kparams["w_taps"]),
            _const_spec(kparams["b_taps"]),
            _const_spec(kparams["w_ro"]),
            _const_spec(kparams["b_ro"]),
        ],
        out_specs=pl.BlockSpec((1, graphs_per_group, OUT_PAD),
                               lambda g: (g, 0, 0)),
        compiler_params=pltpu.CompilerParams(
            dimension_semantics=("parallel",)),
    )(x_groups, adj_groups,
      kparams["w_ri"], kparams["b_ri"],
      kparams["w_taps"], kparams["b_taps"],
      kparams["w_ro"], kparams["b_ro"])


# ----------------------------------------------------------------------------
# Glue: group sizing, block-diagonal adjacency, param prep, wrapper.
# ----------------------------------------------------------------------------
def _choose_group_size(batch_size, n_nodes, target_group_nodes=256):
    """Pick G so G*N ~= target (256 fills the v6e/v7x MXU; 128 suits v5e),
    but keep at least 2 grid steps so both v7x TensorCores get work."""
    g = max(1, min(batch_size, target_group_nodes // max(n_nodes, 1)))
    if batch_size >= 2 and math.ceil(batch_size / g) < 2:
        g = math.ceil(batch_size / 2)
    return g


def build_group_block_adjacency(edge_index, n_nodes, graphs_per_group,
                                dtype=jnp.bfloat16):
    """edge_index: (B_pad, 2, E) int32 (row 0 = source, row 1 = target).
    Returns (num_groups, G*N, G*N) with adj[g, dst, src] = edge multiplicity,
    block-diagonal per graph, so the SimpleConv(sum) shift of every graph in
    the group is a single adj[g] @ x_group matmul."""
    b_pad, _, n_edges = edge_index.shape
    num_groups = b_pad // graphs_per_group
    gn = graphs_per_group * n_nodes
    ei = edge_index.reshape(num_groups, graphs_per_group, 2, n_edges)
    offset = n_nodes * jnp.arange(graphs_per_group, dtype=edge_index.dtype)
    ei = ei + offset[None, :, None, None]
    src = ei[:, :, 0, :].reshape(num_groups, graphs_per_group * n_edges)
    dst = ei[:, :, 1, :].reshape(num_groups, graphs_per_group * n_edges)
    # one-hot einsum keeps the build on the MXU (no serialized scatter); the
    # (num_groups, G*E, G*N) intermediate is tiny at these sizes.
    oh_src = jax.nn.one_hot(src, gn, dtype=jnp.float32)
    oh_dst = jax.nn.one_hot(dst, gn, dtype=jnp.float32)
    adj = jnp.einsum("gek,gel->gkl", oh_dst, oh_src)
    return adj.astype(dtype)   # small-integer multiplicities: exact in bf16


def prepare_kernel_params(params, out_pad=OUT_PAD):
    """Pre-sum per-tap biases; zero-pad the readout to 128 output lanes."""
    out_ch = params["w_ro"].shape[1]
    return {
        "w_ri": params["w_ri"],                              # (F, C)
        "b_ri": params["b_ri"],                              # (1, C)
        "w_taps": params["w_taps"],                          # (L, K+1, C, C)
        "b_taps": params["b_taps"].sum(axis=1),              # (L, 1, C)
        "w_ro": jnp.pad(params["w_ro"], ((0, 0), (0, out_pad - out_ch))),
        "b_ro": jnp.pad(params["b_ro"], ((0, 0), (0, out_pad - out_ch))),
    }


def gnn_critic_forward(observation, action, edge_index, params,
                       *, n_layers, n_taps, target_group_nodes=256):
    # x = cat([obs, act], -1); batch_graph is realized by the block-diagonal
    # per-group adjacency; node-mean + linear readout are folded into the kernel.
    x = jnp.concatenate([observation, action], axis=-1)      # (B, N, F)
    batch_size, n_nodes, f_in = x.shape
    out_ch = params["w_ro"].shape[1]

    g = _choose_group_size(batch_size, n_nodes, target_group_nodes)
    num_groups = math.ceil(batch_size / g)
    b_pad = num_groups * g
    if b_pad > batch_size:                                    # pad batch with dummy graphs
        x = jnp.pad(x, ((0, b_pad - batch_size), (0, 0), (0, 0)))
        edge_index = jnp.pad(edge_index,
                             ((0, b_pad - batch_size), (0, 0), (0, 0)))

    x_groups = x.reshape(num_groups, g * n_nodes, f_in)
    adj_groups = build_group_block_adjacency(edge_index, n_nodes, g,
                                             dtype=jnp.bfloat16)
    kparams = prepare_kernel_params(params)
    out = gcn_critic_pallas(x_groups, adj_groups, kparams,
                            n_layers=n_layers, n_taps=n_taps,
                            graphs_per_group=g, n_nodes=n_nodes)
    # (num_groups, G, 128) -> (B, out_ch): lane 0..out_ch-1 holds the values
    return out[:, :, :out_ch].reshape(b_pad, out_ch)[:batch_size]


# ----------------------------------------------------------------------------
# Pure-JAX reference (unfused: per-node readout, then mean over nodes).
# ----------------------------------------------------------------------------
def build_batched_adjacency(edge_index, n_nodes, dtype=jnp.float32):
    src = edge_index[:, 0, :]
    dst = edge_index[:, 1, :]
    oh_src = jax.nn.one_hot(src, n_nodes, dtype=dtype)
    oh_dst = jax.nn.one_hot(dst, n_nodes, dtype=dtype)
    return jnp.einsum("ben,bem->bnm", oh_dst, oh_src)


def gnn_critic_ref(observation, action, edge_index, params,
                   *, n_layers, n_taps):
    hp = jax.lax.Precision.HIGHEST
    x = jnp.concatenate([observation, action], axis=-1)       # (B, N, F)
    n_nodes = x.shape[1]
    adj = build_batched_adjacency(edge_index, n_nodes)
    h = _leaky_relu(
        jnp.einsum("bnf,fc->bnc", x, params["w_ri"], precision=hp)
        + params["b_ri"])
    for layer in range(n_layers):
        y = _leaky_relu(h)
        z = jnp.einsum("bnc,cd->bnd", y, params["w_taps"][layer, 0],
                       precision=hp) + params["b_taps"][layer, 0]
        cur = y
        for k in range(1, n_taps + 1):
            cur = jnp.einsum("bij,bjc->bic", adj, cur, precision=hp)
            z = z + jnp.einsum("bnc,cd->bnd", cur, params["w_taps"][layer, k],
                               precision=hp) + params["b_taps"][layer, k]
        h = h + z
    out = jnp.einsum("bnc,co->bno", h, params["w_ro"], precision=hp) \
        + params["b_ro"]
    return out.mean(axis=1)                                    # (B, out_ch)


# ----------------------------------------------------------------------------
# Deterministic parameter initialization (synthetic weights, stored (in, out)).
# ----------------------------------------------------------------------------
def init_params(key, in_channels, n_channels, out_channels, n_layers, n_taps):
    ks = jax.random.split(key, 6)
    scale = 0.1
    return {
        "w_ri": scale * jax.random.normal(ks[0], (in_channels, n_channels), jnp.float32),
        "b_ri": scale * jax.random.normal(ks[1], (1, n_channels), jnp.float32),
        "w_taps": scale * jax.random.normal(
            ks[2], (n_layers, n_taps + 1, n_channels, n_channels), jnp.float32),
        "b_taps": scale * jax.random.normal(
            ks[3], (n_layers, n_taps + 1, 1, n_channels), jnp.float32),
        "w_ro": scale * jax.random.normal(ks[4], (n_channels, out_channels), jnp.float32),
        "b_ro": scale * jax.random.normal(ks[5], (1, out_channels), jnp.float32),
    }


if __name__ == "__main__":
    # small problem sizes
    B, N, E = 2, 8, 16          # batch, nodes per graph, edges per graph
    OBS_DIM, ACT_DIM = 6, 2     # -> in_channels = 8
    N_CHANNELS, N_LAYERS, N_TAPS, OUT_CH = 32, 2, 2, 1

    key = jax.random.PRNGKey(0)
    k_obs, k_act, k_edge, k_par = jax.random.split(key, 4)

    observation = jax.random.normal(k_obs, (B, N, OBS_DIM), jnp.float32)
    action = jax.random.normal(k_act, (B, N, ACT_DIM), jnp.float32)
    edge_index = jax.random.randint(k_edge, (B, 2, E), 0, N, dtype=jnp.int32)

    params = init_params(k_par, OBS_DIM + ACT_DIM, N_CHANNELS, OUT_CH,
                         N_LAYERS, N_TAPS)

    out = gnn_critic_forward(observation, action, edge_index, params,
                             n_layers=N_LAYERS, n_taps=N_TAPS)
    out = jax.block_until_ready(out)
    assert out.shape == (B, OUT_CH), out.shape

    ref = gnn_critic_ref(observation, action, edge_index, params,
                         n_layers=N_LAYERS, n_taps=N_TAPS)
    ref = jax.block_until_ready(ref)
    # tolerance covers MXU bf16-pass rounding of f32 matmuls on TPU
    assert jnp.allclose(out, ref, rtol=2e-2, atol=2e-2), (out, ref)

    print("KERNEL_OK")
</pallas_src>

<mosaic_0001>
module attributes {stable_mosaic.version = 11 : i64} {
  func.func @_gcn_group_kernel(%arg0: i32, %arg1: memref<1x8x8xf32, #tpu.memory_space<vmem>>, %arg2: memref<1x8x8xbf16, #tpu.memory_space<vmem>>, %arg3: memref<8x32xf32, #tpu.memory_space<vmem>>, %arg4: memref<1x32xf32, #tpu.memory_space<vmem>>, %arg5: memref<2x3x32x32xf32, #tpu.memory_space<vmem>>, %arg6: memref<2x1x32xf32, #tpu.memory_space<vmem>>, %arg7: memref<32x128xf32, #tpu.memory_space<vmem>>, %arg8: memref<1x128xf32, #tpu.memory_space<vmem>>, %arg9: memref<1x1x128xf32, #tpu.memory_space<vmem>>) attributes {dimension_semantics = [#tpu.dimension_semantics<parallel>], iteration_bounds = array<i64: 2>, scalar_prefetch = 0 : i64, scratch_operands = 0 : i64, tpu.core_type = #tpu.core_type<tc>, window_params = [{transform_indices = @transform_0, window_bounds = array<i64: 1, 8, 8>}, {transform_indices = @transform_1, window_bounds = array<i64: 1, 8, 8>}, {pipeline_mode = #tpu.pipeline_mode<synchronous>, transform_indices = @transform_2, window_bounds = array<i64: 8, 32>}, {pipeline_mode = #tpu.pipeline_mode<synchronous>, transform_indices = @transform_3, window_bounds = array<i64: 1, 32>}, {pipeline_mode = #tpu.pipeline_mode<synchronous>, transform_indices = @transform_4, window_bounds = array<i64: 2, 3, 32, 32>}, {pipeline_mode = #tpu.pipeline_mode<synchronous>, transform_indices = @transform_5, window_bounds = array<i64: 2, 1, 32>}, {pipeline_mode = #tpu.pipeline_mode<synchronous>, transform_indices = @transform_6, window_bounds = array<i64: 32, 128>}, {pipeline_mode = #tpu.pipeline_mode<synchronous>, transform_indices = @transform_7, window_bounds = array<i64: 1, 128>}, {transform_indices = @transform_8, window_bounds = array<i64: 1, 1, 128>}]} {
    %c0 = arith.constant 0 : index
    %c0_0 = arith.constant 0 : index
    %c0_1 = arith.constant 0 : index
    %0 = vector.load %arg1[%c0, %c0_0, %c0_1] : memref<1x8x8xf32, #tpu.memory_space<vmem>>, vector<1x8x8xf32>
    %1 = vector.shape_cast %0 : vector<1x8x8xf32> to vector<8x8xf32>
    %c0_2 = arith.constant 0 : index
    %c0_3 = arith.constant 0 : index
    %c0_4 = arith.constant 0 : index
    %2 = vector.load %arg2[%c0_2, %c0_3, %c0_4] : memref<1x8x8xbf16, #tpu.memory_space<vmem>>, vector<1x8x8xbf16>
    %3 = vector.shape_cast %2 : vector<1x8x8xbf16> to vector<8x8xbf16>
    %4 = arith.extf %3 : vector<8x8xbf16> to vector<8x8xf32>
    %c0_5 = arith.constant 0 : index
    %c0_6 = arith.constant 0 : index
    %5 = vector.load %arg3[%c0_5, %c0_6] : memref<8x32xf32, #tpu.memory_space<vmem>>, vector<8x32xf32>
    %cst = arith.constant dense<0.000000e+00> : vector<8x32xf32>
    %6 = tpu.matmul %1, %5, %cst {dimension_numbers = #tpu.dot_dimension_numbers<[1], [0], [0], [1], [0, 0, 1, 1], [], []>} : vector<8x8xf32>, vector<8x32xf32>, vector<8x32xf32> -> vector<8x32xf32>
    %c0_7 = arith.constant 0 : index
    %c0_8 = arith.constant 0 : index
    %7 = vector.load %arg4[%c0_7, %c0_8] : memref<1x32xf32, #tpu.memory_space<vmem>>, vector<1x32xf32>
    %8 = vector.broadcast %7 : vector<1x32xf32> to vector<8x32xf32>
    %9 = arith.addf %6, %8 : vector<8x32xf32>
    %cst_9 = arith.constant 0.000000e+00 : f32
    %10 = vector.broadcast %cst_9 : f32 to vector<8x32xf32>
    %11 = arith.cmpf oge, %9, %10 : vector<8x32xf32>
    %cst_10 = arith.constant 0.00999999977 : f32
    %12 = vector.broadcast %cst_10 : f32 to vector<8x32xf32>
    %13 = arith.mulf %12, %9 : vector<8x32xf32>
    %14 = arith.select %11, %9, %13 : vector<8x32xi1>, vector<8x32xf32>
    %cst_11 = arith.constant 0.000000e+00 : f32
    %15 = vector.broadcast %cst_11 : f32 to vector<8x32xf32>
    %16 = arith.cmpf oge, %14, %15 : vector<8x32xf32>
    %cst_12 = arith.constant 0.00999999977 : f32
    %17 = vector.broadcast %cst_12 : f32 to vector<8x32xf32>
    %18 = arith.mulf %17, %14 : vector<8x32xf32>
    %19 = arith.select %16, %14, %18 : vector<8x32xi1>, vector<8x32xf32>
    %c0_13 = arith.constant 0 : index
    %c0_14 = arith.constant 0 : index
    %c0_15 = arith.constant 0 : index
    %c0_16 = arith.constant 0 : index
    %20 = vector.load %arg5[%c0_13, %c0_14, %c0_15, %c0_16] : memref<2x3x32x32xf32, #tpu.memory_space<vmem>>, vector<1x1x32x32xf32>
    %21 = vector.shape_cast %20 : vector<1x1x32x32xf32> to vector<32x32xf32>
    %cst_17 = arith.constant dense<0.000000e+00> : vector<8x32xf32>
    %22 = tpu.matmul %19, %21, %cst_17 {dimension_numbers = #tpu.dot_dimension_numbers<[1], [0], [0], [1], [0, 0, 1, 1], [], []>} : vector<8x32xf32>, vector<32x32xf32>, vector<8x32xf32> -> vector<8x32xf32>
    %c0_18 = arith.constant 0 : index
    %c0_19 = arith.constant 0 : index
    %c0_20 = arith.constant 0 : index
    %23 = vector.load %arg6[%c0_18, %c0_19, %c0_20] : memref<2x1x32xf32, #tpu.memory_space<vmem>>, vector<1x1x32xf32>
    %24 = vector.shape_cast %23 : vector<1x1x32xf32> to vector<1x32xf32>
    %25 = vector.broadcast %24 : vector<1x32xf32> to vector<8x32xf32>
    %26 = arith.addf %22, %25 : vector<8x32xf32>
    %cst_21 = arith.constant dense<0.000000e+00> : vector<8x32xf32>
    %27 = tpu.matmul %4, %19, %cst_21 {dimension_numbers = #tpu.dot_dimension_numbers<[1], [0], [0], [1], [0, 0, 1, 1], [], []>} : vector<8x8xf32>, vector<8x32xf32>, vector<8x32xf32> -> vector<8x32xf32>
    %c0_22 = arith.constant 0 : index
    %c1 = arith.constant 1 : index
    %c0_23 = arith.constant 0 : index
    %c0_24 = arith.constant 0 : index
    %28 = vector.load %arg5[%c0_22, %c1, %c0_23, %c0_24] : memref<2x3x32x32xf32, #tpu.memory_space<vmem>>, vector<1x1x32x32xf32>
    %29 = vector.shape_cast %28 : vector<1x1x32x32xf32> to vector<32x32xf32>
    %cst_25 = arith.constant dense<0.000000e+00> : vector<8x32xf32>
    %30 = tpu.matmul %27, %29, %cst_25 {dimension_numbers = #tpu.dot_dimension_numbers<[1], [0], [0], [1], [0, 0, 1, 1], [], []>} : vector<8x32xf32>, vector<32x32xf32>, vector<8x32xf32> -> vector<8x32xf32>
    %31 = arith.addf %26, %30 : vector<8x32xf32>
    %cst_26 = arith.constant dense<0.000000e+00> : vector<8x32xf32>
    %32 = tpu.matmul %4, %27, %cst_26 {dimension_numbers = #tpu.dot_dimension_numbers<[1], [0], [0], [1], [0, 0, 1, 1], [], []>} : vector<8x8xf32>, vector<8x32xf32>, vector<8x32xf32> -> vector<8x32xf32>
    %c0_27 = arith.constant 0 : index
    %c2 = arith.constant 2 : index
    %c0_28 = arith.constant 0 : index
    %c0_29 = arith.constant 0 : index
    %33 = vector.load %arg5[%c0_27, %c2, %c0_28, %c0_29] : memref<2x3x32x32xf32, #tpu.memory_space<vmem>>, vector<1x1x32x32xf32>
    %34 = vector.shape_cast %33 : vector<1x1x32x32xf32> to vector<32x32xf32>
    %cst_30 = arith.constant dense<0.000000e+00> : vector<8x32xf32>
    %35 = tpu.matmul %32, %34, %cst_30 {dimension_numbers = #tpu.dot_dimension_numbers<[1], [0], [0], [1], [0, 0, 1, 1], [], []>} : vector<8x32xf32>, vector<32x32xf32>, vector<8x32xf32> -> vector<8x32xf32>
    %36 = arith.addf %31, %35 : vector<8x32xf32>
    %37 = arith.addf %14, %36 : vector<8x32xf32>
    %cst_31 = arith.constant 0.000000e+00 : f32
    %38 = vector.broadcast %cst_31 : f32 to vector<8x32xf32>
    %39 = arith.cmpf oge, %37, %38 : vector<8x32xf32>
    %cst_32 = arith.constant 0.00999999977 : f32
    %40 = vector.broadcast %cst_32 : f32 to vector<8x32xf32>
    %41 = arith.mulf %40, %37 : vector<8x32xf32>
    %42 = arith.select %39, %37, %41 : vector<8x32xi1>, vector<8x32xf32>
    %c1_33 = arith.constant 1 : index
    %c0_34 = arith.constant 0 : index
    %c0_35 = arith.constant 0 : index
    %c0_36 = arith.constant 0 : index
    %43 = vector.load %arg5[%c1_33, %c0_34, %c0_35, %c0_36] : memref<2x3x32x32xf32, #tpu.memory_space<vmem>>, vector<1x1x32x32xf32>
    %44 = vector.shape_cast %43 : vector<1x1x32x32xf32> to vector<32x32xf32>
    %cst_37 = arith.constant dense<0.000000e+00> : vector<8x32xf32>
    %45 = tpu.matmul %42, %44, %cst_37 {dimension_numbers = #tpu.dot_dimension_numbers<[1], [0], [0], [1], [0, 0, 1, 1], [], []>} : vector<8x32xf32>, vector<32x32xf32>, vector<8x32xf32> -> vector<8x32xf32>
    %c1_38 = arith.constant 1 : index
    %c0_39 = arith.constant 0 : index
    %c0_40 = arith.constant 0 : index
    %46 = vector.load %arg6[%c1_38, %c0_39, %c0_40] : memref<2x1x32xf32, #tpu.memory_space<vmem>>, vector<1x1x32xf32>
    %47 = vector.shape_cast %46 : vector<1x1x32xf32> to vector<1x32xf32>
    %48 = vector.broadcast %47 : vector<1x32xf32> to vector<8x32xf32>
    %49 = arith.addf %45, %48 : vector<8x32xf32>
    %cst_41 = arith.constant dense<0.000000e+00> : vector<8x32xf32>
    %50 = tpu.matmul %4, %42, %cst_41 {dimension_numbers = #tpu.dot_dimension_numbers<[1], [0], [0], [1], [0, 0, 1, 1], [], []>} : vector<8x8xf32>, vector<8x32xf32>, vector<8x32xf32> -> vector<8x32xf32>
    %c1_42 = arith.constant 1 : index
    %c1_43 = arith.constant 1 : index
    %c0_44 = arith.constant 0 : index
    %c0_45 = arith.constant 0 : index
    %51 = vector.load %arg5[%c1_42, %c1_43, %c0_44, %c0_45] : memref<2x3x32x32xf32, #tpu.memory_space<vmem>>, vector<1x1x32x32xf32>
    %52 = vector.shape_cast %51 : vector<1x1x32x32xf32> to vector<32x32xf32>
    %cst_46 = arith.constant dense<0.000000e+00> : vector<8x32xf32>
    %53 = tpu.matmul %50, %52, %cst_46 {dimension_numbers = #tpu.dot_dimension_numbers<[1], [0], [0], [1], [0, 0, 1, 1], [], []>} : vector<8x32xf32>, vector<32x32xf32>, vector<8x32xf32> -> vector<8x32xf32>
    %54 = arith.addf %49, %53 : vector<8x32xf32>
    %cst_47 = arith.constant dense<0.000000e+00> : vector<8x32xf32>
    %55 = tpu.matmul %4, %50, %cst_47 {dimension_numbers = #tpu.dot_dimension_numbers<[1], [0], [0], [1], [0, 0, 1, 1], [], []>} : vector<8x8xf32>, vector<8x32xf32>, vector<8x32xf32> -> vector<8x32xf32>
    %c1_48 = arith.constant 1 : index
    %c2_49 = arith.constant 2 : index
    %c0_50 = arith.constant 0 : index
    %c0_51 = arith.constant 0 : index
    %56 = vector.load %arg5[%c1_48, %c2_49, %c0_50, %c0_51] : memref<2x3x32x32xf32, #tpu.memory_space<vmem>>, vector<1x1x32x32xf32>
    %57 = vector.shape_cast %56 : vector<1x1x32x32xf32> to vector<32x32xf32>
    %cst_52 = arith.constant dense<0.000000e+00> : vector<8x32xf32>
    %58 = tpu.matmul %55, %57, %cst_52 {dimension_numbers = #tpu.dot_dimension_numbers<[1], [0], [0], [1], [0, 0, 1, 1], [], []>} : vector<8x32xf32>, vector<32x32xf32>, vector<8x32xf32> -> vector<8x32xf32>
    %59 = arith.addf %54, %58 : vector<8x32xf32>
    %60 = arith.addf %37, %59 : vector<8x32xf32>
    %61 = tpu.iota {dimensions = array<i32: 0>} : vector<1x8xi32>
    %62 = tpu.iota {dimensions = array<i32: 1>} : vector<1x8xi32>
    %c8_i32 = arith.constant 8 : i32
    %63 = vector.broadcast %c8_i32 : i32 to vector<1x8xi32>
    %64 = arith.muli %61, %63 : vector<1x8xi32>
    %65 = arith.cmpi sge, %62, %64 : vector<1x8xi32>
    %c1_i32 = arith.constant 1 : i32
    %66 = vector.broadcast %c1_i32 : i32 to vector<1x8xi32>
    %67 = arith.addi %61, %66 : vector<1x8xi32>
    %c8_i32_53 = arith.constant 8 : i32
    %68 = vector.broadcast %c8_i32_53 : i32 to vector<1x8xi32>
    %69 = arith.muli %67, %68 : vector<1x8xi32>
    %70 = arith.cmpi slt, %62, %69 : vector<1x8xi32>
    %71 = arith.andi %65, %70 : vector<1x8xi1>
    %cst_54 = arith.constant 1.250000e-01 : f32
    %cst_55 = arith.constant 0.000000e+00 : f32
    %72 = vector.broadcast %cst_54 : f32 to vector<1x8xf32>
    %73 = vector.broadcast %cst_55 : f32 to vector<1x8xf32>
    %74 = arith.select %71, %72, %73 : vector<1x8xi1>, vector<1x8xf32>
    %cst_56 = arith.constant dense<0.000000e+00> : vector<1x32xf32>
    %75 = tpu.matmul %74, %60, %cst_56 {dimension_numbers = #tpu.dot_dimension_numbers<[1], [0], [0], [1], [0, 0, 1, 1], [], []>} : vector<1x8xf32>, vector<8x32xf32>, vector<1x32xf32> -> vector<1x32xf32>
    %c0_57 = arith.constant 0 : index
    %c0_58 = arith.constant 0 : index
    %76 = vector.load %arg7[%c0_57, %c0_58] : memref<32x128xf32, #tpu.memory_space<vmem>>, vector<32x128xf32>
    %cst_59 = arith.constant dense<0.000000e+00> : vector<1x128xf32>
    %77 = tpu.matmul %75, %76, %cst_59 {dimension_numbers = #tpu.dot_dimension_numbers<[1], [0], [0], [1], [0, 0, 1, 1], [], []>} : vector<1x32xf32>, vector<32x128xf32>, vector<1x128xf32> -> vector<1x128xf32>
    %c0_60 = arith.constant 0 : index
    %c0_61 = arith.constant 0 : index
    %78 = vector.load %arg8[%c0_60, %c0_61] : memref<1x128xf32, #tpu.memory_space<vmem>>, vector<1x128xf32>
    %79 = arith.addf %77, %78 : vector<1x128xf32>
    %c0_62 = arith.constant 0 : index
    %c0_63 = arith.constant 0 : index
    %c0_64 = arith.constant 0 : index
    %80 = vector.load %arg9[%c0_62, %c0_63, %c0_64] : memref<1x1x128xf32, #tpu.memory_space<vmem>>, vector<1x1x128xf32>
    %81 = vector.shape_cast %80 : vector<1x1x128xf32> to vector<1x128xf32>
    %82 = vector.shape_cast %79 : vector<1x128xf32> to vector<1x1x128xf32>
    tpu.vector_store %arg9[%c0_62, %c0_63, %c0_64], %82 {strides = array<i32>} : memref<1x1x128xf32, #tpu.memory_space<vmem>>, vector<1x1x128xf32>,
    return
  }
  func.func @transform_0(%arg0: i32) -> (i32, i32, i32) {
    %c0_i32 = arith.constant 0 : i32
    %c0_i32_0 = arith.constant 0 : i32
    %c0_i32_1 = arith.constant 0 : i32
    return %arg0, %c0_i32, %c0_i32_0 : i32, i32, i32
  }
  func.func @transform_1(%arg0: i32) -> (i32, i32, i32) {
    %c0_i32 = arith.constant 0 : i32
    %c0_i32_0 = arith.constant 0 : i32
    %c0_i32_1 = arith.constant 0 : i32
    return %arg0, %c0_i32, %c0_i32_0 : i32, i32, i32
  }
  func.func @transform_2(%arg0: i32) -> (i32, i32) {
    %c0_i32 = arith.constant 0 : i32
    %c0_i32_0 = arith.constant 0 : i32
    %c0_i32_1 = arith.constant 0 : i32
    return %c0_i32, %c0_i32_0 : i32, i32
  }
  func.func @transform_3(%arg0: i32) -> (i32, i32) {
    %c0_i32 = arith.constant 0 : i32
    %c0_i32_0 = arith.constant 0 : i32
    %c0_i32_1 = arith.constant 0 : i32
    return %c0_i32, %c0_i32_0 : i32, i32
  }
  func.func @transform_4(%arg0: i32) -> (i32, i32, i32, i32) {
    %c0_i32 = arith.constant 0 : i32
    %c0_i32_0 = arith.constant 0 : i32
    %c0_i32_1 = arith.constant 0 : i32
    %c0_i32_2 = arith.constant 0 : i32
    %c0_i32_3 = arith.constant 0 : i32
    return %c0_i32, %c0_i32_0, %c0_i32_1, %c0_i32_2 : i32, i32, i32, i32
  }
  func.func @transform_5(%arg0: i32) -> (i32, i32, i32) {
    %c0_i32 = arith.constant 0 : i32
    %c0_i32_0 = arith.constant 0 : i32
    %c0_i32_1 = arith.constant 0 : i32
    %c0_i32_2 = arith.constant 0 : i32
    return %c0_i32, %c0_i32_0, %c0_i32_1 : i32, i32, i32
  }
  func.func @transform_6(%arg0: i32) -> (i32, i32) {
    %c0_i32 = arith.constant 0 : i32
    %c0_i32_0 = arith.constant 0 : i32
    %c0_i32_1 = arith.constant 0 : i32
    return %c0_i32, %c0_i32_0 : i32, i32
  }
  func.func @transform_7(%arg0: i32) -> (i32, i32) {
    %c0_i32 = arith.constant 0 : i32
    %c0_i32_0 = arith.constant 0 : i32
    %c0_i32_1 = arith.constant 0 : i32
    return %c0_i32, %c0_i32_0 : i32, i32
  }
  func.func @transform_8(%arg0: i32) -> (i32, i32, i32) {
    %c0_i32 = arith.constant 0 : i32
    %c0_i32_0 = arith.constant 0 : i32
    %c0_i32_1 = arith.constant 0 : i32
    return %arg0, %c0_i32, %c0_i32_0 : i32, i32, i32
  }
}

</mosaic_0001>

<llo_original>
// kernel: tpu_custom_call.1
$region0: #{tpu_custom_call.1}
  #allocation0 [shape = 'u32[]', space=smem, size = 0x4, offset = 0x4, fixed_abs, tag = 'smem constant byte address 0x4 - core index']
  #allocation1 [shape = 'u32[144,128]{1,0:T(1,128)}', space=vmem, size = 0x12000, scoped, tag = 'internal scratch']
  %s0 = inlined_call_operand.hbm [shape: f32[2,8,8], index: 0, kind: input, shape index: {}]
  %s1 = inlined_call_operand.hbm [shape: bf16[2,8,8], index: 1, kind: input, shape index: {}]
  %s2 = inlined_call_operand.hbm [shape: f32[8,32], index: 2, kind: input, shape index: {}]
  %s3 = inlined_call_operand.vmem [shape: f32[1,32], index: 3, kind: input, shape index: {}]
  %s4 = inlined_call_operand.hbm [shape: f32[2,3,32,32], index: 4, kind: input, shape index: {}]
  %s5 = inlined_call_operand.vmem [shape: f32[2,1,32], index: 5, kind: input, shape index: {}]
  %s6 = inlined_call_operand.hbm [shape: f32[32,128], index: 6, kind: input, shape index: {}]
  %s7 = inlined_call_operand.vmem [shape: f32[1,128], index: 7, kind: input, shape index: {}]
  %s8 = inlined_call_operand.hbm [shape: f32[2,1,128], index: 8, kind: output, shape index: {}]
  %s9 = sld [smem:[#allocation0]]
  $region85: #{tpu_custom_call.1} parent=0
    _
  %s11 = ssub.s32 1, %s9
  %s12 = scalar_select 0, %s11, %s9
  $region1: #{tpu_custom_call.1} parent=0
    #allocation2 [shape = 'u8[8192]{0}', space=vmem, size = 0x2000, scoped, tag = 'input window, operand 0']
    #allocation3 [shape = 's32[2]{0}', space=sflag, size = 0x8, scoped, tag = 'scoped memory for tpu_custom_call.1']
    #allocation4 [shape = 's32[2]{0}', space=sflag, size = 0x8, scoped, tag = 'scoped memory for tpu_custom_call.1']
    #allocation5 [shape = 'u8[4096]{0}', space=vmem, size = 0x1000, scoped, tag = 'input window, operand 1']
    #allocation6 [shape = 's32[2]{0}', space=sflag, size = 0x8, scoped, tag = 'scoped memory for tpu_custom_call.1']
    #allocation7 [shape = 'u8[4096]{0}', space=vmem, size = 0x1000, scoped, tag = 'input window, operand 2, single buffered']
    #allocation8 [shape = 'u8[98304]{0}', space=vmem, size = 0x18000, scoped, tag = 'input window, operand 4, single buffered']
    #allocation9 [shape = 's32[1]{0}', space=sflag, size = 0x4, scoped, tag = 'scoped memory for tpu_custom_call.1']
    #allocation10 [shape = 'u8[16384]{0}', space=vmem, size = 0x4000, scoped, tag = 'input window, operand 6, single buffered']
    #allocation11 [shape = 'u8[1024]{0}', space=vmem, size = 0x400, scoped, tag = 'output window, operand 0']
    %13 = vsyncpa [#allocation3], 0
    %s14 = scalar_lea.sflag [#allocation3], 1
    %15 = vsyncpa %s14, 0
    %16 = vsyncpa [#allocation6], 0
    %s17 = scalar_lea.sflag [#allocation6], 1
    %18 = vsyncpa %s17, 0
    %19 = vsyncpa [#allocation9], 0
    %20 = vsyncpa [#allocation4], 0
    %s21 = scalar_lea.sflag [#allocation4], 1
    %22 = vsyncpa %s21, 0
    loop: start=0, step=1, limit=4
    $region2: #{tpu_custom_call.1} parent=1 // loop_pre_header
      _
    $region3: #{tpu_custom_call.1} parent=1 // loop_header
      %s24 = sphi 0, %s28
      %p25 = scmp.ge.s32.totalorder %s24, 4
      %s34 = sphi 0, %s36
      %s37 = sphi 0, %s34
      %s38 = sphi 0, %s37
      %s54 = sphi 0, %s38
      %s60 = sphi 0, %s62
      %s63 = sphi 0, %s60
      %s64 = sphi 0, %s63
      %s80 = sphi 0, %s64
      %s84 = sphi 0, %s84
      %s86 = sphi 0, %s84
      %s87 = sphi 0, %s86
      %s101 = sphi 0, %s87
      %s105 = sphi 0, %s105
      %s107 = sphi 0, %s105
      %s108 = sphi 0, %s107
      %s122 = sphi 0, %s108
      %s126 = sphi 0, %s126
      %s128 = sphi 0, %s126
      %s129 = sphi 0, %s128
      %s143 = sphi 0, %s129
      %s147 = sphi 0, %s147
      %s149 = sphi 0, %s147
      %s150 = sphi 0, %s149
      %s164 = sphi 0, %s150
      %s168 = sphi 0, %s168
      %s170 = sphi 0, %s168
      %s171 = sphi 0, %s170
      %s185 = sphi 0, %s171
      %s189 = sphi 0, %s189
      %s191 = sphi 0, %s189
      %s192 = sphi 0, %s191
      %s206 = sphi 0, %s192
      %s212 = sphi 0, %s214
      %s215 = sphi 0, %s212
      %s216 = sphi 0, %s215
      %s232 = sphi 0, %s216
    $region4: #{tpu_custom_call.1} parent=1 // loop_header_branch
      %27 = sbr.rel (%p25) target = $region8
    $region5: #{tpu_custom_call.1} parent=1 // loop_body
      %s29 = ssub.s32 %s24, 1
      %s30 = ssub.s32 %s24, 2
      %s31 = sadd.s32 %s24, 1
      %s32 = ssub.s32 %s24, %s31
      %p33 = scmp.eq.s32.totalorder %s32, 0
      %s35 = sadd.s32 %s34, 1
      %s36 = scalar_select %p33, %s34, %s35
      %p39 = pneg %p33
      %p40 = scmp.eq.s32.totalorder %s24, 1
      %p41 = por %p39, %p40
      %p42 = scmp.ne.s32.totalorder %s34, %s37
      %p43 = scmp.eq.s32.totalorder %s24, 0
      %p44 = por %p42, %p43
      %p45 = scmp.ne.s32.totalorder %s34, %s37
      %p46 = scmp.eq.s32.totalorder %s29, 1
      %p47 = por %p45, %p46
      %p48 = scmp.ne.s32.totalorder %s37, %s38
      %p49 = scmp.eq.s32.totalorder %s29, 0
      %p50 = por %p48, %p49
      %p51 = scmp.ne.s32.totalorder %s37, %s38
      %p52 = scmp.eq.s32.totalorder %s30, 1
      %p53 = por %p51, %p52
      %p55 = scmp.ne.s32.totalorder %s38, %s54
      %p56 = scmp.eq.s32.totalorder %s30, 0
      %p57 = por %p55, %p56
      %s58 = ssub.s32 %s24, %s31
      %p59 = scmp.eq.s32.totalorder %s58, 0
      %s61 = sadd.s32 %s60, 1
      %s62 = scalar_select %p59, %s60, %s61
      %p65 = pneg %p59
      %p66 = scmp.eq.s32.totalorder %s24, 1
      %p67 = por %p65, %p66
      %p68 = scmp.ne.s32.totalorder %s60, %s63
      %p69 = scmp.eq.s32.totalorder %s24, 0
      %p70 = por %p68, %p69
      %p71 = scmp.ne.s32.totalorder %s60, %s63
      %p72 = scmp.eq.s32.totalorder %s29, 1
      %p73 = por %p71, %p72
      %p74 = scmp.ne.s32.totalorder %s63, %s64
      %p75 = scmp.eq.s32.totalorder %s29, 0
      %p76 = por %p74, %p75
      %p77 = scmp.ne.s32.totalorder %s63, %s64
      %p78 = scmp.eq.s32.totalorder %s30, 1
      %p79 = por %p77, %p78
      %p81 = scmp.ne.s32.totalorder %s64, %s80
      %p82 = scmp.eq.s32.totalorder %s30, 0
      %p83 = por %p81, %p82
      %s85 = sadd.s32 %s84, 1
      %p88 = scmp.eq.s32.totalorder %s24, 1
      %p89 = scmp.ne.s32.totalorder %s84, %s86
      %p90 = scmp.eq.s32.totalorder %s24, 0
      %p91 = por %p89, %p90
      %p92 = scmp.ne.s32.totalorder %s84, %s86
      %p93 = scmp.eq.s32.totalorder %s29, 1
      %p94 = por %p92, %p93
      %p95 = scmp.ne.s32.totalorder %s86, %s87
      %p96 = scmp.eq.s32.totalorder %s29, 0
      %p97 = por %p95, %p96
      %p98 = scmp.ne.s32.totalorder %s86, %s87
      %p99 = scmp.eq.s32.totalorder %s30, 1
      %p100 = por %p98, %p99
      %p102 = scmp.ne.s32.totalorder %s87, %s101
      %p103 = scmp.eq.s32.totalorder %s30, 0
      %p104 = por %p102, %p103
      %s106 = sadd.s32 %s105, 1
      %p109 = scmp.eq.s32.totalorder %s24, 1
      %p110 = scmp.ne.s32.totalorder %s105, %s107
      %p111 = scmp.eq.s32.totalorder %s24, 0
      %p112 = por %p110, %p111
      %p113 = scmp.ne.s32.totalorder %s105, %s107
      %p114 = scmp.eq.s32.totalorder %s29, 1
      %p115 = por %p113, %p114
      %p116 = scmp.ne.s32.totalorder %s107, %s108
      %p117 = scmp.eq.s32.totalorder %s29, 0
      %p118 = por %p116, %p117
      %p119 = scmp.ne.s32.totalorder %s107, %s108
      %p120 = scmp.eq.s32.totalorder %s30, 1
      %p121 = por %p119, %p120
      %p123 = scmp.ne.s32.totalorder %s108, %s122
      %p124 = scmp.eq.s32.totalorder %s30, 0
      %p125 = por %p123, %p124
      %s127 = sadd.s32 %s126, 1
      %p130 = scmp.eq.s32.totalorder %s24, 1
      %p131 = scmp.ne.s32.totalorder %s126, %s128
      %p132 = scmp.eq.s32.totalorder %s24, 0
      %p133 = por %p131, %p132
      %p134 = scmp.ne.s32.totalorder %s126, %s128
      %p135 = scmp.eq.s32.totalorder %s29, 1
      %p136 = por %p134, %p135
      %p137 = scmp.ne.s32.totalorder %s128, %s129
      %p138 = scmp.eq.s32.totalorder %s29, 0
      %p139 = por %p137, %p138
      %p140 = scmp.ne.s32.totalorder %s128, %s129
      %p141 = scmp.eq.s32.totalorder %s30, 1
      %p142 = por %p140, %p141
      %p144 = scmp.ne.s32.totalorder %s129, %s143
      %p145 = scmp.eq.s32.totalorder %s30, 0
      %p146 = por %p144, %p145
      %s148 = sadd.s32 %s147, 1
      %p151 = scmp.eq.s32.totalorder %s24, 1
      %p152 = scmp.ne.s32.totalorder %s147, %s149
      %p153 = scmp.eq.s32.totalorder %s24, 0
      %p154 = por %p152, %p153
      %p155 = scmp.ne.s32.totalorder %s147, %s149
      %p156 = scmp.eq.s32.totalorder %s29, 1
      %p157 = por %p155, %p156
      %p158 = scmp.ne.s32.totalorder %s149, %s150
      %p159 = scmp.eq.s32.totalorder %s29, 0
      %p160 = por %p158, %p159
      %p161 = scmp.ne.s32.totalorder %s149, %s150
      %p162 = scmp.eq.s32.totalorder %s30, 1
      %p163 = por %p161, %p162
      %p165 = scmp.ne.s32.totalorder %s150, %s164
      %p166 = scmp.eq.s32.totalorder %s30, 0
      %p167 = por %p165, %p166
      %s169 = sadd.s32 %s168, 1
      %p172 = scmp.eq.s32.totalorder %s24, 1
      %p173 = scmp.ne.s32.totalorder %s168, %s170
      %p174 = scmp.eq.s32.totalorder %s24, 0
      %p175 = por %p173, %p174
      %p176 = scmp.ne.s32.totalorder %s168, %s170
      %p177 = scmp.eq.s32.totalorder %s29, 1
      %p178 = por %p176, %p177
      %p179 = scmp.ne.s32.totalorder %s170, %s171
      %p180 = scmp.eq.s32.totalorder %s29, 0
      %p181 = por %p179, %p180
      %p182 = scmp.ne.s32.totalorder %s170, %s171
      %p183 = scmp.eq.s32.totalorder %s30, 1
      %p184 = por %p182, %p183
      %p186 = scmp.ne.s32.totalorder %s171, %s185
      %p187 = scmp.eq.s32.totalorder %s30, 0
      %p188 = por %p186, %p187
      %s190 = sadd.s32 %s189, 1
      %p193 = scmp.eq.s32.totalorder %s24, 1
      %p194 = scmp.ne.s32.totalorder %s189, %s191
      %p195 = scmp.eq.s32.totalorder %s24, 0
      %p196 = por %p194, %p195
      %p197 = scmp.ne.s32.totalorder %s189, %s191
      %p198 = scmp.eq.s32.totalorder %s29, 1
      %p199 = por %p197, %p198
      %p200 = scmp.ne.s32.totalorder %s191, %s192
      %p201 = scmp.eq.s32.totalorder %s29, 0
      %p202 = por %p200, %p201
      %p203 = scmp.ne.s32.totalorder %s191, %s192
      %p204 = scmp.eq.s32.totalorder %s30, 1
      %p205 = por %p203, %p204
      %p207 = scmp.ne.s32.totalorder %s192, %s206
      %p208 = scmp.eq.s32.totalorder %s30, 0
      %p209 = por %p207, %p208
      %s210 = ssub.s32 %s24, %s31
      %p211 = scmp.eq.s32.totalorder %s210, 0
      %s213 = sadd.s32 %s212, 1
      %s214 = scalar_select %p211, %s212, %s213
      %p217 = pneg %p211
      %p218 = scmp.eq.s32.totalorder %s24, 1
      %p219 = por %p217, %p218
      %p220 = scmp.ne.s32.totalorder %s212, %s215
      %p221 = scmp.eq.s32.totalorder %s24, 0
      %p222 = por %p220, %p221
      %p223 = scmp.ne.s32.totalorder %s212, %s215
      %p224 = scmp.eq.s32.totalorder %s29, 1
      %p225 = por %p223, %p224
      %p226 = scmp.ne.s32.totalorder %s215, %s216
      %p227 = scmp.eq.s32.totalorder %s29, 0
      %p228 = por %p226, %p227
      %p229 = scmp.ne.s32.totalorder %s215, %s216
      %p230 = scmp.eq.s32.totalorder %s30, 1
      %p231 = por %p229, %p230
      %p233 = scmp.ne.s32.totalorder %s216, %s232
      %p234 = scmp.eq.s32.totalorder %s30, 0
      %p235 = por %p233, %p234
      %p236 = scmp.le.s32.totalorder 1, %s24
      %p237 = scmp.lt.s32.totalorder %s24, 3
      %p238 = pnand %p236, %p237
      %p239 = pneg %p238
      // Predicated region
      $region9: #{tpu_custom_call.1} parent=5 // pred_check
        _
      $region10: #{tpu_custom_call.1} parent=5 // pred_check_branch
        %241 = sbr.rel (%p238) target = $region12
      $region11: #{tpu_custom_call.1} parent=5 // pred_region
        %s242 = ssub.s32 %s24, 1
        // Predicated region
        $region13: #{tpu_custom_call.1} parent=11 // pred_check
          %p243 = pneg %p97
        $region14: #{tpu_custom_call.1} parent=11 // pred_check_branch
          %245 = sbr.rel (%p243) target = $region16
        $region15: #{tpu_custom_call.1} parent=11 // pred_region
          %s247 = ssub.s32 128, 128
          %248 = vsyncadd [#allocation6], %s247
          %s250 = sshll.u32 [#allocation7], 4
          %s251 = int_to_ptr.vmem [resolvable:$true] %s250
          %253 = dma.hbm_to_vmem [thread:$0]  %s2, 128, %s251, [#allocation6]
        $region16: #{tpu_custom_call.1} parent=11 // pred_fallthru
          _
        // Predicated region
        $region17: #{tpu_custom_call.1} parent=11 // pred_check
          %p254 = pneg %p118
        $region18: #{tpu_custom_call.1} parent=11 // pred_check_branch
          %256 = sbr.rel (%p254) target = $region20
        $region19: #{tpu_custom_call.1} parent=11 // pred_region
          _
        $region20: #{tpu_custom_call.1} parent=11 // pred_fallthru
          _
        // Predicated region
        $region21: #{tpu_custom_call.1} parent=11 // pred_check
          %p257 = pneg %p139
        $region22: #{tpu_custom_call.1} parent=11 // pred_check_branch
          %259 = sbr.rel (%p257) target = $region24
        $region23: #{tpu_custom_call.1} parent=11 // pred_region
          %s261 = ssub.s32 3072, 3072
          %262 = vsyncadd [#allocation9], %s261
          %s263 = sshll.u32 [#allocation8], 4
          %s264 = int_to_ptr.vmem [resolvable:$true] %s263
          %269 = dma.hbm_to_vmem [thread:$0]  %s4, 3072, %s264, [#allocation9], 128, 128, 8
        $region24: #{tpu_custom_call.1} parent=11 // pred_fallthru
          _
        // Predicated region
        $region25: #{tpu_custom_call.1} parent=11 // pred_check
          %p270 = pneg %p160
        $region26: #{tpu_custom_call.1} parent=11 // pred_check_branch
          %272 = sbr.rel (%p270) target = $region28
        $region27: #{tpu_custom_call.1} parent=11 // pred_region
          _
        $region28: #{tpu_custom_call.1} parent=11 // pred_fallthru
          _
        // Predicated region
        $region29: #{tpu_custom_call.1} parent=11 // pred_check
          %p273 = pneg %p181
        $region30: #{tpu_custom_call.1} parent=11 // pred_check_branch
          %275 = sbr.rel (%p273) target = $region32
        $region31: #{tpu_custom_call.1} parent=11 // pred_region
          %s277 = ssub.s32 512, 512
          %278 = vsyncadd [#allocation9], %s277
          %s279 = sshll.u32 [#allocation10], 4
          %s280 = int_to_ptr.vmem [resolvable:$true] %s279
          %285 = dma.hbm_to_vmem [thread:$0]  %s6, 512, %s280, [#allocation9], 128, 128, 8
        $region32: #{tpu_custom_call.1} parent=11 // pred_fallthru
          _
        // Predicated region
        $region33: #{tpu_custom_call.1} parent=11 // pred_check
          %p286 = pneg %p202
        $region34: #{tpu_custom_call.1} parent=11 // pred_check_branch
          %288 = sbr.rel (%p286) target = $region36
        $region35: #{tpu_custom_call.1} parent=11 // pred_region
          _
        $region36: #{tpu_custom_call.1} parent=11 // pred_fallthru
          _
      $region12: #{tpu_custom_call.1} parent=5 // pred_fallthru
        _
      %p289 = scmp.lt.s32.totalorder %s24, 2
      // Predicated region
      $region37: #{tpu_custom_call.1} parent=5 // pred_check
        %p290 = pneg %p289
      $region38: #{tpu_custom_call.1} parent=5 // pred_check_branch
        %292 = sbr.rel (%p290) target = $region40
      $region39: #{tpu_custom_call.1} parent=5 // pred_region
        // Predicated region
        $region41: #{tpu_custom_call.1} parent=39 // pred_check
          %p293 = pneg %p44
        $region42: #{tpu_custom_call.1} parent=39 // pred_check_branch
          %295 = sbr.rel (%p293) target = $region44
        $region43: #{tpu_custom_call.1} parent=39 // pred_region
          %s296 = sand.u32 %s34, 1
          %s297 = scalar_lea.sflag [#allocation3], %s296
          %s298 = sand.u32 %s34, 1
          %s299 = smul.addr %s298, 8
          %s300 = scalar_lea.vmem [#allocation2], %s299
          %s302 = ssub.s32 128, 128
          %303 = vsyncadd %s297, %s302
          %s304 = smul.addr %s24, 128
          %s305 = scalar_lea.hbm %s0, %s304
          %s307 = sshll.u32 %s300, 4
          %s308 = int_to_ptr.vmem [resolvable:$true] %s307
          %310 = dma.hbm_to_vmem [thread:$0]  %s305, 128, %s308, %s297
        $region44: #{tpu_custom_call.1} parent=39 // pred_fallthru
          _
        // Predicated region
        $region45: #{tpu_custom_call.1} parent=39 // pred_check
          %p311 = pneg %p70
        $region46: #{tpu_custom_call.1} parent=39 // pred_check_branch
          %313 = sbr.rel (%p311) target = $region48
        $region47: #{tpu_custom_call.1} parent=39 // pred_region
          %s314 = sand.u32 %s24, 1
          %s315 = scalar_lea.sflag [#allocation6], %s314
          %s316 = sand.u32 %s60, 1
          %s317 = smul.addr %s316, 4
          %s318 = scalar_lea.vmem [#allocation5], %s317
          %s320 = ssub.s32 64, 64
          %321 = vsyncadd %s315, %s320
          %s322 = smul.addr %s24, 64
          %s323 = scalar_lea.hbm %s1, %s322
          %s325 = sshll.u32 %s318, 4
          %s326 = int_to_ptr.vmem [resolvable:$true] %s325
          %328 = dma.hbm_to_vmem [thread:$0]  %s323, 64, %s326, %s315
        $region48: #{tpu_custom_call.1} parent=39 // pred_fallthru
          _
      $region40: #{tpu_custom_call.1} parent=5 // pred_fallthru
        _
      %p329 = scmp.le.s32.totalorder 1, %s24
      %p330 = scmp.lt.s32.totalorder %s24, 3
      %p331 = pnand %p329, %p330
      %p332 = pneg %p331
      // Predicated region
      $region49: #{tpu_custom_call.1} parent=5 // pred_check
        _
      $region50: #{tpu_custom_call.1} parent=5 // pred_check_branch
        %334 = sbr.rel (%p331) target = $region52
      $region51: #{tpu_custom_call.1} parent=5 // pred_region
        %s335 = ssub.s32 %s24, 1
        %s336 = sand.u32 %s37, 1
        %s337 = scalar_lea.sflag [#allocation3], %s336
        %s338 = sand.u32 %s37, 1
        %s339 = smul.addr %s338, 8
        %s340 = scalar_lea.vmem [#allocation2], %s339
        // Predicated region
        $region53: #{tpu_custom_call.1} parent=51 // pred_check
          %p341 = pneg %p50
        $region54: #{tpu_custom_call.1} parent=51 // pred_check_branch
          %343 = sbr.rel (%p341) target = $region56
        $region55: #{tpu_custom_call.1} parent=51 // pred_region
          %344 = dma.done %s337, 128
        $region56: #{tpu_custom_call.1} parent=51 // pred_fallthru
          _
        %s345 = sand.u32 %s29, 1
        %s346 = scalar_lea.sflag [#allocation6], %s345
        %s347 = sand.u32 %s63, 1
        %s348 = smul.addr %s347, 4
        %s349 = scalar_lea.vmem [#allocation5], %s348
        // Predicated region
        $region57: #{tpu_custom_call.1} parent=51 // pred_check
          %p350 = pneg %p76
        $region58: #{tpu_custom_call.1} parent=51 // pred_check_branch
          %352 = sbr.rel (%p350) target = $region60
        $region59: #{tpu_custom_call.1} parent=51 // pred_region
          %353 = dma.done %s346, 64
        $region60: #{tpu_custom_call.1} parent=51 // pred_fallthru
          _
        // Predicated region
        $region61: #{tpu_custom_call.1} parent=51 // pred_check
          %p354 = pneg %p97
        $region62: #{tpu_custom_call.1} parent=51 // pred_check_branch
          %356 = sbr.rel (%p354) target = $region64
        $region63: #{tpu_custom_call.1} parent=51 // pred_region
          %357 = dma.done [#allocation6], 128
        $region64: #{tpu_custom_call.1} parent=51 // pred_fallthru
          _
        // Predicated region
        $region65: #{tpu_custom_call.1} parent=51 // pred_check
          %p358 = pneg %p139
        $region66: #{tpu_custom_call.1} parent=51 // pred_check_branch
          %360 = sbr.rel (%p358) target = $region68
        $region67: #{tpu_custom_call.1} parent=51 // pred_region
          %361 = dma.done [#allocation9], 3072
        $region68: #{tpu_custom_call.1} parent=51 // pred_fallthru
          _
        // Predicated region
        $region69: #{tpu_custom_call.1} parent=51 // pred_check
          %p362 = pneg %p181
        $region70: #{tpu_custom_call.1} parent=51 // pred_check_branch
          %364 = sbr.rel (%p362) target = $region72
        $region71: #{tpu_custom_call.1} parent=51 // pred_region
          %365 = dma.done [#allocation9], 512
        $region72: #{tpu_custom_call.1} parent=51 // pred_fallthru
          _
        %s366 = sand.u32 %s37, 1
        %s367 = scalar_lea.sflag [#allocation3], %s366
        %s368 = sand.u32 %s37, 1
        %s369 = smul.addr %s368, 8
        %s370 = scalar_lea.vmem [#allocation2], %s369
        %p371 = pneg %p50
        %p372 = pneg %p47
        %s373 = sand.u32 %s29, 1
        %s374 = scalar_lea.sflag [#allocation6], %s373
        %s375 = sand.u32 %s63, 1
        %s376 = smul.addr %s375, 4
        %s377 = scalar_lea.vmem [#allocation5], %s376
        %p378 = pneg %p76
        %p379 = pneg %p73
        %p380 = pneg %p97
        %p381 = pneg %p94
        %p382 = pneg %p118
        %p383 = pneg %p115
        %p384 = pneg %p139
        %p385 = pneg %p136
        %p386 = pneg %p160
        %p387 = pneg %p157
        %p388 = pneg %p181
        %p389 = pneg %p178
        %p390 = pneg %p202
        %p391 = pneg %p199
        %p392 = pneg %p228
        %p393 = pneg %p225
        %s394 = sand.u32 %s215, 1
        %s395 = scalar_lea.sflag [#allocation4], %s394
        %s396 = sand.u32 %s215, 1
        %s397 = scalar_lea.vmem [#allocation11], %s396
        %v398 = vld [vmem:[%s340] sm:$0xff]
        %v399 = vld [vmem:[%s349] sm:$0xf]
        %v400 = vunpack.c.l.bf16 %v399
        %v401 = vld [vmem:[#allocation7] sm:$0xff]
        %v402 = vld [vmem:[%s3] sm:$0x1]
        %v404 = vlaneseq
        %v405 = vshrl.u32 %v404, 7
        %v406 = vsub.s32 0, %v405
        %v407 = vrot.slane %v402, %v406
        %vm409 = vcmask 64512
        %v411 = vsel %vm409, %v398, 0
        %413 = vmatprep.subr.mxu0 0.0
        %414 = vmatpush1.msra.mxu0 0.0
        %415 = vmatprep.subr.mxu0 0.0
        %416 = vmatpush1.msra.mxu0 0.0
        %417 = vmatprep.subr.mxu0 0.0
        %418 = vmatpush1.msra.mxu0 0.0
        %419 = vmatprep.subr.mxu0 0.0
        %420 = vmatpush1.msra.mxu0 0.0
        %421 = vmatprep.subr.mxu0 0.0
        %422 = vmatpush1.msra.mxu0 0.0
        %423 = vmatprep.subr.mxu0 0.0
        %424 = vmatpush1.msra.mxu0 0.0
        %425 = vmatprep.subr.mxu0 0.0
        %426 = vmatpush1.msra.mxu0 0.0
        %427 = vmatprep.subr.mxu0 0.0
        %428 = vmatpush1.msra.mxu0 0.0
        %429 = vmatprep.subr.mxu0 0.0
        %430 = vmatpush1.msra.mxu0 0.0
        %431 = vmatprep.subr.mxu0 0.0
        %432 = vmatpush1.msra.mxu0 0.0
        %433 = vmatprep.subr.mxu0 0.0
        %434 = vmatpush1.msra.mxu0 0.0
        %435 = vmatprep.subr.mxu0 0.0
        %436 = vmatpush1.msra.mxu0 0.0
        %437 = vmatprep.subr.mxu0 0.0
        %438 = vmatpush1.msra.mxu0 0.0
        %439 = vmatprep.subr.mxu0 0.0
        %440 = vmatpush1.msra.mxu0 0.0
        %441 = vmatprep.subr.mxu0 0.0
        %442 = vmatpush1.msra.mxu0 0.0
        %443 = vmatprep.subr.mxu0 0.0
        %444 = vmatpush1.msra.mxu0 %v401
        %445 = vmatprep.subr.mxu0 0.0
        %446 = vmatpush2.msra.mxu0 0.0
        %447 = vmatprep.subr.mxu0 0.0
        %448 = vmatpush2.msra.mxu0 0.0
        %449 = vmatprep.subr.mxu0 0.0
        %450 = vmatpush2.msra.mxu0 0.0
        %451 = vmatprep.subr.mxu0 0.0
        %452 = vmatpush2.msra.mxu0 0.0
        %453 = vmatprep.subr.mxu0 0.0
        %454 = vmatpush2.msra.mxu0 0.0
        %455 = vmatprep.subr.mxu0 0.0
        %456 = vmatpush2.msra.mxu0 0.0
        %457 = vmatprep.subr.mxu0 0.0
        %458 = vmatpush2.msra.mxu0 0.0
        %459 = vmatprep.subr.mxu0 0.0
        %460 = vmatpush2.msra.mxu0 0.0
        %461 = vmatprep.subr.mxu0 0.0
        %462 = vmatpush2.msra.mxu0 0.0
        %463 = vmatprep.subr.mxu0 0.0
        %464 = vmatpush2.msra.mxu0 0.0
        %465 = vmatprep.subr.mxu0 0.0
        %466 = vmatpush2.msra.mxu0 0.0
        %467 = vmatprep.subr.mxu0 0.0
        %468 = vmatpush2.msra.mxu0 0.0
        %469 = vmatprep.subr.mxu0 0.0
        %470 = vmatpush2.msra.mxu0 0.0
        %471 = vmatprep.subr.mxu0 0.0
        %472 = vmatpush2.msra.mxu0 0.0
        %473 = vmatprep.subr.mxu0 0.0
        %474 = vmatpush2.msra.mxu0 0.0
        %475 = vmatprep.subr.mxu0 0.0
        %476 = vmatpush2.msra.mxu0 0.0
        %477 = vmatprep.mubr.f32.mxu0 0.0
        %478 = vmatmul.mubr.f32.gmra.mxu0 %v411
        %v479 = vpop.f32.mrf.mxu0
        %v480 = vadd.f32 %v407, %v479
        %v481 = vpop.f32.mrf.mxu0
        %482 = vdwg.mxu0
        %vm483 = vcmp.ge.f32.partialorder %v480, 0.0
        %v484 = vmul.f32 %v480, 0.01
        %v485 = vsel %vm483, %v480, %v484
        %vm486 = vcmp.ge.f32.partialorder %v485, 0.0
        %v487 = vmul.f32 %v485, 0.01
        %v488 = vsel %vm486, %v485, %v487
        %v489 = vld [vmem:[#allocation8] sm:$0xff]
        %v490 = vld [vmem:[#allocation8 + $0x8] sm:$0xff]
        %v491 = vld [vmem:[#allocation8 + $0x10] sm:$0xff]
        %v492 = vld [vmem:[#allocation8 + $0x18] sm:$0xff]
        %v493 = vld [vmem:[%s5] sm:$0x1]
        %v495 = vlaneseq
        %v496 = vshrl.u32 %v495, 7
        %v497 = vsub.s32 0, %v496
        %v498 = vrot.slane %v493, %v497
        %vm500 = vcmask 261120
        %v502 = vsel %vm500, %v488, 0
        %504 = vmatprep.subr.mxu0 0.0
        %505 = vmatpush1.msra.mxu0 0.0
        %506 = vmatprep.subr.mxu0 0.0
        %507 = vmatpush1.msra.mxu0 0.0
        %508 = vmatprep.subr.mxu0 0.0
        %509 = vmatpush1.msra.mxu0 0.0
        %510 = vmatprep.subr.mxu0 0.0
        %511 = vmatpush1.msra.mxu0 0.0
        %512 = vmatprep.subr.mxu0 0.0
        %513 = vmatpush1.msra.mxu0 0.0
        %514 = vmatprep.subr.mxu0 0.0
        %515 = vmatpush1.msra.mxu0 0.0
        %516 = vmatprep.subr.mxu0 0.0
        %517 = vmatpush1.msra.mxu0 0.0
        %518 = vmatprep.subr.mxu0 0.0
        %519 = vmatpush1.msra.mxu0 0.0
        %520 = vmatprep.subr.mxu0 0.0
        %521 = vmatpush1.msra.mxu0 0.0
        %522 = vmatprep.subr.mxu0 0.0
        %523 = vmatpush1.msra.mxu0 0.0
        %524 = vmatprep.subr.mxu0 0.0
        %525 = vmatpush1.msra.mxu0 0.0
        %526 = vmatprep.subr.mxu0 0.0
        %527 = vmatpush1.msra.mxu0 0.0
        %528 = vmatprep.subr.mxu0 0.0
        %529 = vmatpush1.msra.mxu0 %v492
        %530 = vmatprep.subr.mxu0 0.0
        %531 = vmatpush1.msra.mxu0 %v491
        %532 = vmatprep.subr.mxu0 0.0
        %533 = vmatpush1.msra.mxu0 %v490
        %534 = vmatprep.subr.mxu0 0.0
        %535 = vmatpush1.msra.mxu0 %v489
        %536 = vmatprep.subr.mxu0 0.0
        %537 = vmatpush2.msra.mxu0 0.0
        %538 = vmatprep.subr.mxu0 0.0
        %539 = vmatpush2.msra.mxu0 0.0
        %540 = vmatprep.subr.mxu0 0.0
        %541 = vmatpush2.msra.mxu0 0.0
        %542 = vmatprep.subr.mxu0 0.0
        %543 = vmatpush2.msra.mxu0 0.0
        %544 = vmatprep.subr.mxu0 0.0
        %545 = vmatpush2.msra.mxu0 0.0
        %546 = vmatprep.subr.mxu0 0.0
        %547 = vmatpush2.msra.mxu0 0.0
        %548 = vmatprep.subr.mxu0 0.0
        %549 = vmatpush2.msra.mxu0 0.0
        %550 = vmatprep.subr.mxu0 0.0
        %551 = vmatpush2.msra.mxu0 0.0
        %552 = vmatprep.subr.mxu0 0.0
        %553 = vmatpush2.msra.mxu0 0.0
        %554 = vmatprep.subr.mxu0 0.0
        %555 = vmatpush2.msra.mxu0 0.0
        %556 = vmatprep.subr.mxu0 0.0
        %557 = vmatpush2.msra.mxu0 0.0
        %558 = vmatprep.subr.mxu0 0.0
        %559 = vmatpush2.msra.mxu0 0.0
        %560 = vmatprep.subr.mxu0 0.0
        %561 = vmatpush2.msra.mxu0 0.0
        %562 = vmatprep.subr.mxu0 0.0
        %563 = vmatpush2.msra.mxu0 0.0
        %564 = vmatprep.subr.mxu0 0.0
        %565 = vmatpush2.msra.mxu0 0.0
        %566 = vmatprep.subr.mxu0 0.0
        %567 = vmatpush2.msra.mxu0 0.0
        %568 = vmatprep.mubr.f32.mxu0 0.0
        %569 = vmatmul.mubr.f32.gmra.mxu0 %v502
        %v570 = vpop.f32.mrf.mxu0
        %v571 = vadd.f32 %v498, %v570
        %v572 = vpop.f32.mrf.mxu0
        %573 = vdwg.mxu0
        %v575 = vsel %vm409, %v400, 0
        %577 = vmatprep.subr.mxu0 0.0
        %578 = vmatpush1.msra.mxu0 0.0
        %579 = vmatprep.subr.mxu0 0.0
        %580 = vmatpush1.msra.mxu0 0.0
        %581 = vmatprep.subr.mxu0 0.0
        %582 = vmatpush1.msra.mxu0 0.0
        %583 = vmatprep.subr.mxu0 0.0
        %584 = vmatpush1.msra.mxu0 0.0
        %585 = vmatprep.subr.mxu0 0.0
        %586 = vmatpush1.msra.mxu0 0.0
        %587 = vmatprep.subr.mxu0 0.0
        %588 = vmatpush1.msra.mxu0 0.0
        %589 = vmatprep.subr.mxu0 0.0
        %590 = vmatpush1.msra.mxu0 0.0
        %591 = vmatprep.subr.mxu0 0.0
        %592 = vmatpush1.msra.mxu0 0.0
        %593 = vmatprep.subr.mxu0 0.0
        %594 = vmatpush1.msra.mxu0 0.0
        %595 = vmatprep.subr.mxu0 0.0
        %596 = vmatpush1.msra.mxu0 0.0
        %597 = vmatprep.subr.mxu0 0.0
        %598 = vmatpush1.msra.mxu0 0.0
        %599 = vmatprep.subr.mxu0 0.0
        %600 = vmatpush1.msra.mxu0 0.0
        %601 = vmatprep.subr.mxu0 0.0
        %602 = vmatpush1.msra.mxu0 0.0
        %603 = vmatprep.subr.mxu0 0.0
        %604 = vmatpush1.msra.mxu0 0.0
        %605 = vmatprep.subr.mxu0 0.0
        %606 = vmatpush1.msra.mxu0 0.0
        %607 = vmatprep.subr.mxu0 0.0
        %608 = vmatpush1.msra.mxu0 %v488
        %609 = vmatprep.subr.mxu0 0.0
        %610 = vmatpush2.msra.mxu0 0.0
        %611 = vmatprep.subr.mxu0 0.0
        %612 = vmatpush2.msra.mxu0 0.0
        %613 = vmatprep.subr.mxu0 0.0
        %614 = vmatpush2.msra.mxu0 0.0
        %615 = vmatprep.subr.mxu0 0.0
        %616 = vmatpush2.msra.mxu0 0.0
        %617 = vmatprep.subr.mxu0 0.0
        %618 = vmatpush2.msra.mxu0 0.0
        %619 = vmatprep.subr.mxu0 0.0
        %620 = vmatpush2.msra.mxu0 0.0
        %621 = vmatprep.subr.mxu0 0.0
        %622 = vmatpush2.msra.mxu0 0.0
        %623 = vmatprep.subr.mxu0 0.0
        %624 = vmatpush2.msra.mxu0 0.0
        %625 = vmatprep.subr.mxu0 0.0
        %626 = vmatpush2.msra.mxu0 0.0
        %627 = vmatprep.subr.mxu0 0.0
        %628 = vmatpush2.msra.mxu0 0.0
        %629 = vmatprep.subr.mxu0 0.0
        %630 = vmatpush2.msra.mxu0 0.0
        %631 = vmatprep.subr.mxu0 0.0
        %632 = vmatpush2.msra.mxu0 0.0
        %633 = vmatprep.subr.mxu0 0.0
        %634 = vmatpush2.msra.mxu0 0.0
        %635 = vmatprep.subr.mxu0 0.0
        %636 = vmatpush2.msra.mxu0 0.0
        %637 = vmatprep.subr.mxu0 0.0
        %638 = vmatpush2.msra.mxu0 0.0
        %639 = vmatprep.subr.mxu0 0.0
        %640 = vmatpush2.msra.mxu0 0.0
        %641 = vmatprep.mubr.f32.mxu0 0.0
        %642 = vmatmul.mubr.f32.gmra.mxu0 %v575
        %v643 = vpop.f32.mrf.mxu0
        %v644 = vadd.f32 0.0, %v643
        %v645 = vpop.f32.mrf.mxu0
        %646 = vdwg.mxu0
        %s647 = scalar_lea.vmem [#allocation8], 32
        %v648 = vld [vmem:[%s647] sm:$0xff]
        %v649 = vld [vmem:[%s647 + $0x8] sm:$0xff]
        %v650 = vld [vmem:[%s647 + $0x10] sm:$0xff]
        %v651 = vld [vmem:[%s647 + $0x18] sm:$0xff]
        %v653 = vsel %vm500, %v644, 0
        %655 = vmatprep.subr.mxu0 0.0
        %656 = vmatpush1.msra.mxu0 0.0
        %657 = vmatprep.subr.mxu0 0.0
        %658 = vmatpush1.msra.mxu0 0.0
        %659 = vmatprep.subr.mxu0 0.0
        %660 = vmatpush1.msra.mxu0 0.0
        %661 = vmatprep.subr.mxu0 0.0
        %662 = vmatpush1.msra.mxu0 0.0
        %663 = vmatprep.subr.mxu0 0.0
        %664 = vmatpush1.msra.mxu0 0.0
        %665 = vmatprep.subr.mxu0 0.0
        %666 = vmatpush1.msra.mxu0 0.0
        %667 = vmatprep.subr.mxu0 0.0
        %668 = vmatpush1.msra.mxu0 0.0
        %669 = vmatprep.subr.mxu0 0.0
        %670 = vmatpush1.msra.mxu0 0.0
        %671 = vmatprep.subr.mxu0 0.0
        %672 = vmatpush1.msra.mxu0 0.0
        %673 = vmatprep.subr.mxu0 0.0
        %674 = vmatpush1.msra.mxu0 0.0
        %675 = vmatprep.subr.mxu0 0.0
        %676 = vmatpush1.msra.mxu0 0.0
        %677 = vmatprep.subr.mxu0 0.0
        %678 = vmatpush1.msra.mxu0 0.0
        %679 = vmatprep.subr.mxu0 0.0
        %680 = vmatpush1.msra.mxu0 %v651
        %681 = vmatprep.subr.mxu0 0.0
        %682 = vmatpush1.msra.mxu0 %v650
        %683 = vmatprep.subr.mxu0 0.0
        %684 = vmatpush1.msra.mxu0 %v649
        %685 = vmatprep.subr.mxu0 0.0
        %686 = vmatpush1.msra.mxu0 %v648
        %687 = vmatprep.subr.mxu0 0.0
        %688 = vmatpush2.msra.mxu0 0.0
        %689 = vmatprep.subr.mxu0 0.0
        %690 = vmatpush2.msra.mxu0 0.0
        %691 = vmatprep.subr.mxu0 0.0
        %692 = vmatpush2.msra.mxu0 0.0
        %693 = vmatprep.subr.mxu0 0.0
        %694 = vmatpush2.msra.mxu0 0.0
        %695 = vmatprep.subr.mxu0 0.0
        %696 = vmatpush2.msra.mxu0 0.0
        %697 = vmatprep.subr.mxu0 0.0
        %698 = vmatpush2.msra.mxu0 0.0
        %699 = vmatprep.subr.mxu0 0.0
        %700 = vmatpush2.msra.mxu0 0.0
        %701 = vmatprep.subr.mxu0 0.0
        %702 = vmatpush2.msra.mxu0 0.0
        %703 = vmatprep.subr.mxu0 0.0
        %704 = vmatpush2.msra.mxu0 0.0
        %705 = vmatprep.subr.mxu0 0.0
        %706 = vmatpush2.msra.mxu0 0.0
        %707 = vmatprep.subr.mxu0 0.0
        %708 = vmatpush2.msra.mxu0 0.0
        %709 = vmatprep.subr.mxu0 0.0
        %710 = vmatpush2.msra.mxu0 0.0
        %711 = vmatprep.subr.mxu0 0.0
        %712 = vmatpush2.msra.mxu0 0.0
        %713 = vmatprep.subr.mxu0 0.0
        %714 = vmatpush2.msra.mxu0 0.0
        %715 = vmatprep.subr.mxu0 0.0
        %716 = vmatpush2.msra.mxu0 0.0
        %717 = vmatprep.subr.mxu0 0.0
        %718 = vmatpush2.msra.mxu0 0.0
        %719 = vmatprep.mubr.f32.mxu0 0.0
        %720 = vmatmul.mubr.f32.gmra.mxu0 %v653
        %v721 = vpop.f32.mrf.mxu0
        %v722 = vadd.f32 0.0, %v721
        %v723 = vpop.f32.mrf.mxu0
        %724 = vdwg.mxu0
        %v725 = vadd.f32 %v571, %v722
        %726 = vmatprep.subr.mxu0 0.0
        %727 = vmatpush1.msra.mxu0 0.0
        %728 = vmatprep.subr.mxu0 0.0
        %729 = vmatpush1.msra.mxu0 0.0
        %730 = vmatprep.subr.mxu0 0.0
        %731 = vmatpush1.msra.mxu0 0.0
        %732 = vmatprep.subr.mxu0 0.0
        %733 = vmatpush1.msra.mxu0 0.0
        %734 = vmatprep.subr.mxu0 0.0
        %735 = vmatpush1.msra.mxu0 0.0
        %736 = vmatprep.subr.mxu0 0.0
        %737 = vmatpush1.msra.mxu0 0.0
        %738 = vmatprep.subr.mxu0 0.0
        %739 = vmatpush1.msra.mxu0 0.0
        %740 = vmatprep.subr.mxu0 0.0
        %741 = vmatpush1.msra.mxu0 0.0
        %742 = vmatprep.subr.mxu0 0.0
        %743 = vmatpush1.msra.mxu0 0.0
        %744 = vmatprep.subr.mxu0 0.0
        %745 = vmatpush1.msra.mxu0 0.0
        %746 = vmatprep.subr.mxu0 0.0
        %747 = vmatpush1.msra.mxu0 0.0
        %748 = vmatprep.subr.mxu0 0.0
        %749 = vmatpush1.msra.mxu0 0.0
        %750 = vmatprep.subr.mxu0 0.0
        %751 = vmatpush1.msra.mxu0 0.0
        %752 = vmatprep.subr.mxu0 0.0
        %753 = vmatpush1.msra.mxu0 0.0
        %754 = vmatprep.subr.mxu0 0.0
        %755 = vmatpush1.msra.mxu0 0.0
        %756 = vmatprep.subr.mxu0 0.0
        %757 = vmatpush1.msra.mxu0 %v644
        %758 = vmatprep.subr.mxu0 0.0
        %759 = vmatpush2.msra.mxu0 0.0
        %760 = vmatprep.subr.mxu0 0.0
        %761 = vmatpush2.msra.mxu0 0.0
        %762 = vmatprep.subr.mxu0 0.0
        %763 = vmatpush2.msra.mxu0 0.0
        %764 = vmatprep.subr.mxu0 0.0
        %765 = vmatpush2.msra.mxu0 0.0
        %766 = vmatprep.subr.mxu0 0.0
        %767 = vmatpush2.msra.mxu0 0.0
        %768 = vmatprep.subr.mxu0 0.0
        %769 = vmatpush2.msra.mxu0 0.0
        %770 = vmatprep.subr.mxu0 0.0
        %771 = vmatpush2.msra.mxu0 0.0
        %772 = vmatprep.subr.mxu0 0.0
        %773 = vmatpush2.msra.mxu0 0.0
        %774 = vmatprep.subr.mxu0 0.0
        %775 = vmatpush2.msra.mxu0 0.0
        %776 = vmatprep.subr.mxu0 0.0
        %777 = vmatpush2.msra.mxu0 0.0
        %778 = vmatprep.subr.mxu0 0.0
        %779 = vmatpush2.msra.mxu0 0.0
        %780 = vmatprep.subr.mxu0 0.0
        %781 = vmatpush2.msra.mxu0 0.0
        %782 = vmatprep.subr.mxu0 0.0
        %783 = vmatpush2.msra.mxu0 0.0
        %784 = vmatprep.subr.mxu0 0.0
        %785 = vmatpush2.msra.mxu0 0.0
        %786 = vmatprep.subr.mxu0 0.0
        %787 = vmatpush2.msra.mxu0 0.0
        %788 = vmatprep.subr.mxu0 0.0
        %789 = vmatpush2.msra.mxu0 0.0
        %790 = vmatprep.mubr.f32.mxu0 0.0
        %791 = vmatmul.mubr.f32.gmra.mxu0 %v575
        %v792 = vpop.f32.mrf.mxu0
        %v793 = vadd.f32 0.0, %v792
        %v794 = vpop.f32.mrf.mxu0
        %795 = vdwg.mxu0
        %s796 = scalar_lea.vmem [#allocation8], 64
        %v797 = vld [vmem:[%s796] sm:$0xff]
        %v798 = vld [vmem:[%s796 + $0x8] sm:$0xff]
        %v799 = vld [vmem:[%s796 + $0x10] sm:$0xff]
        %v800 = vld [vmem:[%s796 + $0x18] sm:$0xff]
        %v802 = vsel %vm500, %v793, 0
        %804 = vmatprep.subr.mxu0 0.0
        %805 = vmatpush1.msra.mxu0 0.0
        %806 = vmatprep.subr.mxu0 0.0
        %807 = vmatpush1.msra.mxu0 0.0
        %808 = vmatprep.subr.mxu0 0.0
        %809 = vmatpush1.msra.mxu0 0.0
        %810 = vmatprep.subr.mxu0 0.0
        %811 = vmatpush1.msra.mxu0 0.0
        %812 = vmatprep.subr.mxu0 0.0
        %813 = vmatpush1.msra.mxu0 0.0
        %814 = vmatprep.subr.mxu0 0.0
        %815 = vmatpush1.msra.mxu0 0.0
        %816 = vmatprep.subr.mxu0 0.0
        %817 = vmatpush1.msra.mxu0 0.0
        %818 = vmatprep.subr.mxu0 0.0
        %819 = vmatpush1.msra.mxu0 0.0
        %820 = vmatprep.subr.mxu0 0.0
        %821 = vmatpush1.msra.mxu0 0.0
        %822 = vmatprep.subr.mxu0 0.0
        %823 = vmatpush1.msra.mxu0 0.0
        %824 = vmatprep.subr.mxu0 0.0
        %825 = vmatpush1.msra.mxu0 0.0
        %826 = vmatprep.subr.mxu0 0.0
        %827 = vmatpush1.msra.mxu0 0.0
        %828 = vmatprep.subr.mxu0 0.0
        %829 = vmatpush1.msra.mxu0 %v800
        %830 = vmatprep.subr.mxu0 0.0
        %831 = vmatpush1.msra.mxu0 %v799
        %832 = vmatprep.subr.mxu0 0.0
        %833 = vmatpush1.msra.mxu0 %v798
        %834 = vmatprep.subr.mxu0 0.0
        %835 = vmatpush1.msra.mxu0 %v797
        %836 = vmatprep.subr.mxu0 0.0
        %837 = vmatpush2.msra.mxu0 0.0
        %838 = vmatprep.subr.mxu0 0.0
        %839 = vmatpush2.msra.mxu0 0.0
        %840 = vmatprep.subr.mxu0 0.0
        %841 = vmatpush2.msra.mxu0 0.0
        %842 = vmatprep.subr.mxu0 0.0
        %843 = vmatpush2.msra.mxu0 0.0
        %844 = vmatprep.subr.mxu0 0.0
        %845 = vmatpush2.msra.mxu0 0.0
        %846 = vmatprep.subr.mxu0 0.0
        %847 = vmatpush2.msra.mxu0 0.0
        %848 = vmatprep.subr.mxu0 0.0
        %849 = vmatpush2.msra.mxu0 0.0
        %850 = vmatprep.subr.mxu0 0.0
        %851 = vmatpush2.msra.mxu0 0.0
        %852 = vmatprep.subr.mxu0 0.0
        %853 = vmatpush2.msra.mxu0 0.0
        %854 = vmatprep.subr.mxu0 0.0
        %855 = vmatpush2.msra.mxu0 0.0
        %856 = vmatprep.subr.mxu0 0.0
        %857 = vmatpush2.msra.mxu0 0.0
        %858 = vmatprep.subr.mxu0 0.0
        %859 = vmatpush2.msra.mxu0 0.0
        %860 = vmatprep.subr.mxu0 0.0
        %861 = vmatpush2.msra.mxu0 0.0
        %862 = vmatprep.subr.mxu0 0.0
        %863 = vmatpush2.msra.mxu0 0.0
        %864 = vmatprep.subr.mxu0 0.0
        %865 = vmatpush2.msra.mxu0 0.0
        %866 = vmatprep.subr.mxu0 0.0
        %867 = vmatpush2.msra.mxu0 0.0
        %868 = vmatprep.mubr.f32.mxu0 0.0
        %869 = vmatmul.mubr.f32.gmra.mxu0 %v802
        %v870 = vpop.f32.mrf.mxu0
        %v871 = vadd.f32 0.0, %v870
        %v872 = vpop.f32.mrf.mxu0
        %873 = vdwg.mxu0
        %v874 = vadd.f32 %v725, %v871
        %v875 = vadd.f32 %v485, %v874
        %vm876 = vcmp.ge.f32.partialorder %v875, 0.0
        %v877 = vmul.f32 %v875, 0.01
        %v878 = vsel %vm876, %v875, %v877
        %s879 = scalar_lea.vmem [#allocation8], 96
        %v880 = vld [vmem:[%s879] sm:$0xff]
        %v881 = vld [vmem:[%s879 + $0x8] sm:$0xff]
        %v882 = vld [vmem:[%s879 + $0x10] sm:$0xff]
        %v883 = vld [vmem:[%s879 + $0x18] sm:$0xff]
        %s884 = scalar_lea.vmem %s5, 1
        %v885 = vld [vmem:[%s884] sm:$0x1]
        %v887 = vlaneseq
        %v888 = vshrl.u32 %v887, 7
        %v889 = vsub.s32 0, %v888
        %v890 = vrot.slane %v885, %v889
        %v893 = vsel %vm500, %v878, 0
        %895 = vmatprep.subr.mxu0 0.0
        %896 = vmatpush1.msra.mxu0 0.0
        %897 = vmatprep.subr.mxu0 0.0
        %898 = vmatpush1.msra.mxu0 0.0
        %899 = vmatprep.subr.mxu0 0.0
        %900 = vmatpush1.msra.mxu0 0.0
        %901 = vmatprep.subr.mxu0 0.0
        %902 = vmatpush1.msra.mxu0 0.0
        %903 = vmatprep.subr.mxu0 0.0
        %904 = vmatpush1.msra.mxu0 0.0
        %905 = vmatprep.subr.mxu0 0.0
        %906 = vmatpush1.msra.mxu0 0.0
        %907 = vmatprep.subr.mxu0 0.0
        %908 = vmatpush1.msra.mxu0 0.0
        %909 = vmatprep.subr.mxu0 0.0
        %910 = vmatpush1.msra.mxu0 0.0
        %911 = vmatprep.subr.mxu0 0.0
        %912 = vmatpush1.msra.mxu0 0.0
        %913 = vmatprep.subr.mxu0 0.0
        %914 = vmatpush1.msra.mxu0 0.0
        %915 = vmatprep.subr.mxu0 0.0
        %916 = vmatpush1.msra.mxu0 0.0
        %917 = vmatprep.subr.mxu0 0.0
        %918 = vmatpush1.msra.mxu0 0.0
        %919 = vmatprep.subr.mxu0 0.0
        %920 = vmatpush1.msra.mxu0 %v883
        %921 = vmatprep.subr.mxu0 0.0
        %922 = vmatpush1.msra.mxu0 %v882
        %923 = vmatprep.subr.mxu0 0.0
        %924 = vmatpush1.msra.mxu0 %v881
        %925 = vmatprep.subr.mxu0 0.0
        %926 = vmatpush1.msra.mxu0 %v880
        %927 = vmatprep.subr.mxu0 0.0
        %928 = vmatpush2.msra.mxu0 0.0
        %929 = vmatprep.subr.mxu0 0.0
        %930 = vmatpush2.msra.mxu0 0.0
        %931 = vmatprep.subr.mxu0 0.0
        %932 = vmatpush2.msra.mxu0 0.0
        %933 = vmatprep.subr.mxu0 0.0
        %934 = vmatpush2.msra.mxu0 0.0
        %935 = vmatprep.subr.mxu0 0.0
        %936 = vmatpush2.msra.mxu0 0.0
        %937 = vmatprep.subr.mxu0 0.0
        %938 = vmatpush2.msra.mxu0 0.0
        %939 = vmatprep.subr.mxu0 0.0
        %940 = vmatpush2.msra.mxu0 0.0
        %941 = vmatprep.subr.mxu0 0.0
        %942 = vmatpush2.msra.mxu0 0.0
        %943 = vmatprep.subr.mxu0 0.0
        %944 = vmatpush2.msra.mxu0 0.0
        %945 = vmatprep.subr.mxu0 0.0
        %946 = vmatpush2.msra.mxu0 0.0
        %947 = vmatprep.subr.mxu0 0.0
        %948 = vmatpush2.msra.mxu0 0.0
        %949 = vmatprep.subr.mxu0 0.0
        %950 = vmatpush2.msra.mxu0 0.0
        %951 = vmatprep.subr.mxu0 0.0
        %952 = vmatpush2.msra.mxu0 0.0
        %953 = vmatprep.subr.mxu0 0.0
        %954 = vmatpush2.msra.mxu0 0.0
        %955 = vmatprep.subr.mxu0 0.0
        %956 = vmatpush2.msra.mxu0 0.0
        %957 = vmatprep.subr.mxu0 0.0
        %958 = vmatpush2.msra.mxu0 0.0
        %959 = vmatprep.mubr.f32.mxu0 0.0
        %960 = vmatmul.mubr.f32.gmra.mxu0 %v893
        %v961 = vpop.f32.mrf.mxu0
        %v962 = vadd.f32 %v890, %v961
        %v963 = vpop.f32.mrf.mxu0
        %964 = vdwg.mxu0
        %965 = vmatprep.subr.mxu0 0.0
        %966 = vmatpush1.msra.mxu0 0.0
        %967 = vmatprep.subr.mxu0 0.0
        %968 = vmatpush1.msra.mxu0 0.0
        %969 = vmatprep.subr.mxu0 0.0
        %970 = vmatpush1.msra.mxu0 0.0
        %971 = vmatprep.subr.mxu0 0.0
        %972 = vmatpush1.msra.mxu0 0.0
        %973 = vmatprep.subr.mxu0 0.0
        %974 = vmatpush1.msra.mxu0 0.0
        %975 = vmatprep.subr.mxu0 0.0
        %976 = vmatpush1.msra.mxu0 0.0
        %977 = vmatprep.subr.mxu0 0.0
        %978 = vmatpush1.msra.mxu0 0.0
        %979 = vmatprep.subr.mxu0 0.0
        %980 = vmatpush1.msra.mxu0 0.0
        %981 = vmatprep.subr.mxu0 0.0
        %982 = vmatpush1.msra.mxu0 0.0
        %983 = vmatprep.subr.mxu0 0.0
        %984 = vmatpush1.msra.mxu0 0.0
        %985 = vmatprep.subr.mxu0 0.0
        %986 = vmatpush1.msra.mxu0 0.0
        %987 = vmatprep.subr.mxu0 0.0
        %988 = vmatpush1.msra.mxu0 0.0
        %989 = vmatprep.subr.mxu0 0.0
        %990 = vmatpush1.msra.mxu0 0.0
        %991 = vmatprep.subr.mxu0 0.0
        %992 = vmatpush1.msra.mxu0 0.0
        %993 = vmatprep.subr.mxu0 0.0
        %994 = vmatpush1.msra.mxu0 0.0
        %995 = vmatprep.subr.mxu0 0.0
        %996 = vmatpush1.msra.mxu0 %v878
        %997 = vmatprep.subr.mxu0 0.0
        %998 = vmatpush2.msra.mxu0 0.0
        %999 = vmatprep.subr.mxu0 0.0
        %1000 = vmatpush2.msra.mxu0 0.0
        %1001 = vmatprep.subr.mxu0 0.0
        %1002 = vmatpush2.msra.mxu0 0.0
        %1003 = vmatprep.subr.mxu0 0.0
        %1004 = vmatpush2.msra.mxu0 0.0
        %1005 = vmatprep.subr.mxu0 0.0
        %1006 = vmatpush2.msra.mxu0 0.0
        %1007 = vmatprep.subr.mxu0 0.0
        %1008 = vmatpush2.msra.mxu0 0.0
        %1009 = vmatprep.subr.mxu0 0.0
        %1010 = vmatpush2.msra.mxu0 0.0
        %1011 = vmatprep.subr.mxu0 0.0
        %1012 = vmatpush2.msra.mxu0 0.0
        %1013 = vmatprep.subr.mxu0 0.0
        %1014 = vmatpush2.msra.mxu0 0.0
        %1015 = vmatprep.subr.mxu0 0.0
        %1016 = vmatpush2.msra.mxu0 0.0
        %1017 = vmatprep.subr.mxu0 0.0
        %1018 = vmatpush2.msra.mxu0 0.0
        %1019 = vmatprep.subr.mxu0 0.0
        %1020 = vmatpush2.msra.mxu0 0.0
        %1021 = vmatprep.subr.mxu0 0.0
        %1022 = vmatpush2.msra.mxu0 0.0
        %1023 = vmatprep.subr.mxu0 0.0
        %1024 = vmatpush2.msra.mxu0 0.0
        %1025 = vmatprep.subr.mxu0 0.0
        %1026 = vmatpush2.msra.mxu0 0.0
        %1027 = vmatprep.subr.mxu0 0.0
        %1028 = vmatpush2.msra.mxu0 0.0
        %1029 = vmatprep.mubr.f32.mxu0 0.0
        %1030 = vmatmul.mubr.f32.gmra.mxu0 %v575
        %v1031 = vpop.f32.mrf.mxu0
        %v1032 = vadd.f32 0.0, %v1031
        %v1033 = vpop.f32.mrf.mxu0
        %1034 = vdwg.mxu0
        %s1035 = scalar_lea.vmem [#allocation8], 128
        %v1036 = vld [vmem:[%s1035] sm:$0xff]
        %v1037 = vld [vmem:[%s1035 + $0x8] sm:$0xff]
        %v1038 = vld [vmem:[%s1035 + $0x10] sm:$0xff]
        %v1039 = vld [vmem:[%s1035 + $0x18] sm:$0xff]
        %v1041 = vsel %vm500, %v1032, 0
        %1043 = vmatprep.subr.mxu0 0.0
        %1044 = vmatpush1.msra.mxu0 0.0
        %1045 = vmatprep.subr.mxu0 0.0
        %1046 = vmatpush1.msra.mxu0 0.0
        %1047 = vmatprep.subr.mxu0 0.0
        %1048 = vmatpush1.msra.mxu0 0.0
        %1049 = vmatprep.subr.mxu0 0.0
        %1050 = vmatpush1.msra.mxu0 0.0
        %1051 = vmatprep.subr.mxu0 0.0
        %1052 = vmatpush1.msra.mxu0 0.0
        %1053 = vmatprep.subr.mxu0 0.0
        %1054 = vmatpush1.msra.mxu0 0.0
        %1055 = vmatprep.subr.mxu0 0.0
        %1056 = vmatpush1.msra.mxu0 0.0
        %1057 = vmatprep.subr.mxu0 0.0
        %1058 = vmatpush1.msra.mxu0 0.0
        %1059 = vmatprep.subr.mxu0 0.0
        %1060 = vmatpush1.msra.mxu0 0.0
        %1061 = vmatprep.subr.mxu0 0.0
        %1062 = vmatpush1.msra.mxu0 0.0
        %1063 = vmatprep.subr.mxu0 0.0
        %1064 = vmatpush1.msra.mxu0 0.0
        %1065 = vmatprep.subr.mxu0 0.0
        %1066 = vmatpush1.msra.mxu0 0.0
        %1067 = vmatprep.subr.mxu0 0.0
        %1068 = vmatpush1.msra.mxu0 %v1039
        %1069 = vmatprep.subr.mxu0 0.0
        %1070 = vmatpush1.msra.mxu0 %v1038
        %1071 = vmatprep.subr.mxu0 0.0
        %1072 = vmatpush1.msra.mxu0 %v1037
        %1073 = vmatprep.subr.mxu0 0.0
        %1074 = vmatpush1.msra.mxu0 %v1036
        %1075 = vmatprep.subr.mxu0 0.0
        %1076 = vmatpush2.msra.mxu0 0.0
        %1077 = vmatprep.subr.mxu0 0.0
        %1078 = vmatpush2.msra.mxu0 0.0
        %1079 = vmatprep.subr.mxu0 0.0
        %1080 = vmatpush2.msra.mxu0 0.0
        %1081 = vmatprep.subr.mxu0 0.0
        %1082 = vmatpush2.msra.mxu0 0.0
        %1083 = vmatprep.subr.mxu0 0.0
        %1084 = vmatpush2.msra.mxu0 0.0
        %1085 = vmatprep.subr.mxu0 0.0
        %1086 = vmatpush2.msra.mxu0 0.0
        %1087 = vmatprep.subr.mxu0 0.0
        %1088 = vmatpush2.msra.mxu0 0.0
        %1089 = vmatprep.subr.mxu0 0.0
        %1090 = vmatpush2.msra.mxu0 0.0
        %1091 = vmatprep.subr.mxu0 0.0
        %1092 = vmatpush2.msra.mxu0 0.0
        %1093 = vmatprep.subr.mxu0 0.0
        %1094 = vmatpush2.msra.mxu0 0.0
        %1095 = vmatprep.subr.mxu0 0.0
        %1096 = vmatpush2.msra.mxu0 0.0
        %1097 = vmatprep.subr.mxu0 0.0
        %1098 = vmatpush2.msra.mxu0 0.0
        %1099 = vmatprep.subr.mxu0 0.0
        %1100 = vmatpush2.msra.mxu0 0.0
        %1101 = vmatprep.subr.mxu0 0.0
        %1102 = vmatpush2.msra.mxu0 0.0
        %1103 = vmatprep.subr.mxu0 0.0
        %1104 = vmatpush2.msra.mxu0 0.0
        %1105 = vmatprep.subr.mxu0 0.0
        %1106 = vmatpush2.msra.mxu0 0.0
        %1107 = vmatprep.mubr.f32.mxu0 0.0
        %1108 = vmatmul.mubr.f32.gmra.mxu0 %v1041
        %v1109 = vpop.f32.mrf.mxu0
        %v1110 = vadd.f32 0.0, %v1109
        %v1111 = vpop.f32.mrf.mxu0
        %1112 = vdwg.mxu0
        %v1113 = vadd.f32 %v962, %v1110
        %1114 = vmatprep.subr.mxu0 0.0
        %1115 = vmatpush1.msra.mxu0 0.0
        %1116 = vmatprep.subr.mxu0 0.0
        %1117 = vmatpush1.msra.mxu0 0.0
        %1118 = vmatprep.subr.mxu0 0.0
        %1119 = vmatpush1.msra.mxu0 0.0
        %1120 = vmatprep.subr.mxu0 0.0
        %1121 = vmatpush1.msra.mxu0 0.0
        %1122 = vmatprep.subr.mxu0 0.0
        %1123 = vmatpush1.msra.mxu0 0.0
        %1124 = vmatprep.subr.mxu0 0.0
        %1125 = vmatpush1.msra.mxu0 0.0
        %1126 = vmatprep.subr.mxu0 0.0
        %1127 = vmatpush1.msra.mxu0 0.0
        %1128 = vmatprep.subr.mxu0 0.0
        %1129 = vmatpush1.msra.mxu0 0.0
        %1130 = vmatprep.subr.mxu0 0.0
        %1131 = vmatpush1.msra.mxu0 0.0
        %1132 = vmatprep.subr.mxu0 0.0
        %1133 = vmatpush1.msra.mxu0 0.0
        %1134 = vmatprep.subr.mxu0 0.0
        %1135 = vmatpush1.msra.mxu0 0.0
        %1136 = vmatprep.subr.mxu0 0.0
        %1137 = vmatpush1.msra.mxu0 0.0
        %1138 = vmatprep.subr.mxu0 0.0
        %1139 = vmatpush1.msra.mxu0 0.0
        %1140 = vmatprep.subr.mxu0 0.0
        %1141 = vmatpush1.msra.mxu0 0.0
        %1142 = vmatprep.subr.mxu0 0.0
        %1143 = vmatpush1.msra.mxu0 0.0
        %1144 = vmatprep.subr.mxu0 0.0
        %1145 = vmatpush1.msra.mxu0 %v1032
        %1146 = vmatprep.subr.mxu0 0.0
        %1147 = vmatpush2.msra.mxu0 0.0
        %1148 = vmatprep.subr.mxu0 0.0
        %1149 = vmatpush2.msra.mxu0 0.0
        %1150 = vmatprep.subr.mxu0 0.0
        %1151 = vmatpush2.msra.mxu0 0.0
        %1152 = vmatprep.subr.mxu0 0.0
        %1153 = vmatpush2.msra.mxu0 0.0
        %1154 = vmatprep.subr.mxu0 0.0
        %1155 = vmatpush2.msra.mxu0 0.0
        %1156 = vmatprep.subr.mxu0 0.0
        %1157 = vmatpush2.msra.mxu0 0.0
        %1158 = vmatprep.subr.mxu0 0.0
        %1159 = vmatpush2.msra.mxu0 0.0
        %1160 = vmatprep.subr.mxu0 0.0
        %1161 = vmatpush2.msra.mxu0 0.0
        %1162 = vmatprep.subr.mxu0 0.0
        %1163 = vmatpush2.msra.mxu0 0.0
        %1164 = vmatprep.subr.mxu0 0.0
        %1165 = vmatpush2.msra.mxu0 0.0
        %1166 = vmatprep.subr.mxu0 0.0
        %1167 = vmatpush2.msra.mxu0 0.0
        %1168 = vmatprep.subr.mxu0 0.0
        %1169 = vmatpush2.msra.mxu0 0.0
        %1170 = vmatprep.subr.mxu0 0.0
        %1171 = vmatpush2.msra.mxu0 0.0
        %1172 = vmatprep.subr.mxu0 0.0
        %1173 = vmatpush2.msra.mxu0 0.0
        %1174 = vmatprep.subr.mxu0 0.0
        %1175 = vmatpush2.msra.mxu0 0.0
        %1176 = vmatprep.subr.mxu0 0.0
        %1177 = vmatpush2.msra.mxu0 0.0
        %1178 = vmatprep.mubr.f32.mxu0 0.0
        %1179 = vmatmul.mubr.f32.gmra.mxu0 %v575
        %v1180 = vpop.f32.mrf.mxu0
        %v1181 = vadd.f32 0.0, %v1180
        %v1182 = vpop.f32.mrf.mxu0
        %1183 = vdwg.mxu0
        %s1184 = scalar_lea.vmem [#allocation8], 160
        %v1185 = vld [vmem:[%s1184] sm:$0xff]
        %v1186 = vld [vmem:[%s1184 + $0x8] sm:$0xff]
        %v1187 = vld [vmem:[%s1184 + $0x10] sm:$0xff]
        %v1188 = vld [vmem:[%s1184 + $0x18] sm:$0xff]
        %v1190 = vsel %vm500, %v1181, 0
        %1192 = vmatprep.subr.mxu0 0.0
        %1193 = vmatpush1.msra.mxu0 0.0
        %1194 = vmatprep.subr.mxu0 0.0
        %1195 = vmatpush1.msra.mxu0 0.0
        %1196 = vmatprep.subr.mxu0 0.0
        %1197 = vmatpush1.msra.mxu0 0.0
        %1198 = vmatprep.subr.mxu0 0.0
        %1199 = vmatpush1.msra.mxu0 0.0
        %1200 = vmatprep.subr.mxu0 0.0
        %1201 = vmatpush1.msra.mxu0 0.0
        %1202 = vmatprep.subr.mxu0 0.0
        %1203 = vmatpush1.msra.mxu0 0.0
        %1204 = vmatprep.subr.mxu0 0.0
        %1205 = vmatpush1.msra.mxu0 0.0
        %1206 = vmatprep.subr.mxu0 0.0
        %1207 = vmatpush1.msra.mxu0 0.0
        %1208 = vmatprep.subr.mxu0 0.0
        %1209 = vmatpush1.msra.mxu0 0.0
        %1210 = vmatprep.subr.mxu0 0.0
        %1211 = vmatpush1.msra.mxu0 0.0
        %1212 = vmatprep.subr.mxu0 0.0
        %1213 = vmatpush1.msra.mxu0 0.0
        %1214 = vmatprep.subr.mxu0 0.0
        %1215 = vmatpush1.msra.mxu0 0.0
        %1216 = vmatprep.subr.mxu0 0.0
        %1217 = vmatpush1.msra.mxu0 %v1188
        %1218 = vmatprep.subr.mxu0 0.0
        %1219 = vmatpush1.msra.mxu0 %v1187
        %1220 = vmatprep.subr.mxu0 0.0
        %1221 = vmatpush1.msra.mxu0 %v1186
        %1222 = vmatprep.subr.mxu0 0.0
        %1223 = vmatpush1.msra.mxu0 %v1185
        %1224 = vmatprep.subr.mxu0 0.0
        %1225 = vmatpush2.msra.mxu0 0.0
        %1226 = vmatprep.subr.mxu0 0.0
        %1227 = vmatpush2.msra.mxu0 0.0
        %1228 = vmatprep.subr.mxu0 0.0
        %1229 = vmatpush2.msra.mxu0 0.0
        %1230 = vmatprep.subr.mxu0 0.0
        %1231 = vmatpush2.msra.mxu0 0.0
        %1232 = vmatprep.subr.mxu0 0.0
        %1233 = vmatpush2.msra.mxu0 0.0
        %1234 = vmatprep.subr.mxu0 0.0
        %1235 = vmatpush2.msra.mxu0 0.0
        %1236 = vmatprep.subr.mxu0 0.0
        %1237 = vmatpush2.msra.mxu0 0.0
        %1238 = vmatprep.subr.mxu0 0.0
        %1239 = vmatpush2.msra.mxu0 0.0
        %1240 = vmatprep.subr.mxu0 0.0
        %1241 = vmatpush2.msra.mxu0 0.0
        %1242 = vmatprep.subr.mxu0 0.0
        %1243 = vmatpush2.msra.mxu0 0.0
        %1244 = vmatprep.subr.mxu0 0.0
        %1245 = vmatpush2.msra.mxu0 0.0
        %1246 = vmatprep.subr.mxu0 0.0
        %1247 = vmatpush2.msra.mxu0 0.0
        %1248 = vmatprep.subr.mxu0 0.0
        %1249 = vmatpush2.msra.mxu0 0.0
        %1250 = vmatprep.subr.mxu0 0.0
        %1251 = vmatpush2.msra.mxu0 0.0
        %1252 = vmatprep.subr.mxu0 0.0
        %1253 = vmatpush2.msra.mxu0 0.0
        %1254 = vmatprep.subr.mxu0 0.0
        %1255 = vmatpush2.msra.mxu0 0.0
        %1256 = vmatprep.mubr.f32.mxu0 0.0
        %1257 = vmatmul.mubr.f32.gmra.mxu0 %v1190
        %v1258 = vpop.f32.mrf.mxu0
        %v1259 = vadd.f32 0.0, %v1258
        %v1260 = vpop.f32.mrf.mxu0
        %1261 = vdwg.mxu0
        %v1262 = vadd.f32 %v1113, %v1259
        %v1263 = vadd.f32 %v875, %v1262
        %v1264 = vlaneseq
        %v1265 = vshrl.u32 %v1264, 7
        %v1266 = vlaneseq
        %v1267 = vand.u32 %v1266, 127
        %v1268 = vmul.u32 %v1265, 8
        %vm1269 = vcmp.ge.s32.totalorder %v1267, %v1268
        %v1270 = vadd.s32 %v1265, 1
        %v1271 = vmul.u32 %v1270, 8
        %vm1272 = vcmp.lt.s32.totalorder %v1267, %v1271
        %vm1273 = vmand %vm1269, %vm1272
        %v1274 = vsel %vm1273, 0.125, 0.0
        %v1276 = vsel %vm409, %v1274, 0
        %1278 = vmatprep.subr.mxu0 0.0
        %1279 = vmatpush1.msra.mxu0 0.0
        %1280 = vmatprep.subr.mxu0 0.0
        %1281 = vmatpush1.msra.mxu0 0.0
        %1282 = vmatprep.subr.mxu0 0.0
        %1283 = vmatpush1.msra.mxu0 0.0
        %1284 = vmatprep.subr.mxu0 0.0
        %1285 = vmatpush1.msra.mxu0 0.0
        %1286 = vmatprep.subr.mxu0 0.0
        %1287 = vmatpush1.msra.mxu0 0.0
        %1288 = vmatprep.subr.mxu0 0.0
        %1289 = vmatpush1.msra.mxu0 0.0
        %1290 = vmatprep.subr.mxu0 0.0
        %1291 = vmatpush1.msra.mxu0 0.0
        %1292 = vmatprep.subr.mxu0 0.0
        %1293 = vmatpush1.msra.mxu0 0.0
        %1294 = vmatprep.subr.mxu0 0.0
        %1295 = vmatpush1.msra.mxu0 0.0
        %1296 = vmatprep.subr.mxu0 0.0
        %1297 = vmatpush1.msra.mxu0 0.0
        %1298 = vmatprep.subr.mxu0 0.0
        %1299 = vmatpush1.msra.mxu0 0.0
        %1300 = vmatprep.subr.mxu0 0.0
        %1301 = vmatpush1.msra.mxu0 0.0
        %1302 = vmatprep.subr.mxu0 0.0
        %1303 = vmatpush1.msra.mxu0 0.0
        %1304 = vmatprep.subr.mxu0 0.0
        %1305 = vmatpush1.msra.mxu0 0.0
        %1306 = vmatprep.subr.mxu0 0.0
        %1307 = vmatpush1.msra.mxu0 0.0
        %1308 = vmatprep.subr.mxu0 0.0
        %1309 = vmatpush1.msra.mxu0 %v1263
        %1310 = vmatprep.subr.mxu0 0.0
        %1311 = vmatpush2.msra.mxu0 0.0
        %1312 = vmatprep.subr.mxu0 0.0
        %1313 = vmatpush2.msra.mxu0 0.0
        %1314 = vmatprep.subr.mxu0 0.0
        %1315 = vmatpush2.msra.mxu0 0.0
        %1316 = vmatprep.subr.mxu0 0.0
        %1317 = vmatpush2.msra.mxu0 0.0
        %1318 = vmatprep.subr.mxu0 0.0
        %1319 = vmatpush2.msra.mxu0 0.0
        %1320 = vmatprep.subr.mxu0 0.0
        %1321 = vmatpush2.msra.mxu0 0.0
        %1322 = vmatprep.subr.mxu0 0.0
        %1323 = vmatpush2.msra.mxu0 0.0
        %1324 = vmatprep.subr.mxu0 0.0
        %1325 = vmatpush2.msra.mxu0 0.0
        %1326 = vmatprep.subr.mxu0 0.0
        %1327 = vmatpush2.msra.mxu0 0.0
        %1328 = vmatprep.subr.mxu0 0.0
        %1329 = vmatpush2.msra.mxu0 0.0
        %1330 = vmatprep.subr.mxu0 0.0
        %1331 = vmatpush2.msra.mxu0 0.0
        %1332 = vmatprep.subr.mxu0 0.0
        %1333 = vmatpush2.msra.mxu0 0.0
        %1334 = vmatprep.subr.mxu0 0.0
        %1335 = vmatpush2.msra.mxu0 0.0
        %1336 = vmatprep.subr.mxu0 0.0
        %1337 = vmatpush2.msra.mxu0 0.0
        %1338 = vmatprep.subr.mxu0 0.0
        %1339 = vmatpush2.msra.mxu0 0.0
        %1340 = vmatprep.subr.mxu0 0.0
        %1341 = vmatpush2.msra.mxu0 0.0
        %1342 = vmatprep.mubr.f32.mxu0 0.0
        %1343 = vmatmul.mubr.f32.gmra.mxu0 %v1276
        %v1344 = vpop.f32.mrf.mxu0
        %v1345 = vadd.f32 0.0, %v1344
        %v1346 = vpop.f32.mrf.mxu0
        %1347 = vdwg.mxu0
        %v1348 = vld [vmem:[#allocation10] sm:$0xff]
        %v1349 = vld [vmem:[#allocation10 + $0x8] sm:$0xff]
        %v1350 = vld [vmem:[#allocation10 + $0x10] sm:$0xff]
        %v1351 = vld [vmem:[#allocation10 + $0x18] sm:$0xff]
        %v1352 = vld [vmem:[%s7] sm:$0x1]
        %v1354 = vsel %vm500, %v1345, 0
        %1356 = vmatprep.subr.mxu0 0.0
        %1357 = vmatpush1.msra.mxu0 0.0
        %1358 = vmatprep.subr.mxu0 0.0
        %1359 = vmatpush1.msra.mxu0 0.0
        %1360 = vmatprep.subr.mxu0 0.0
        %1361 = vmatpush1.msra.mxu0 0.0
        %1362 = vmatprep.subr.mxu0 0.0
        %1363 = vmatpush1.msra.mxu0 0.0
        %1364 = vmatprep.subr.mxu0 0.0
        %1365 = vmatpush1.msra.mxu0 0.0
        %1366 = vmatprep.subr.mxu0 0.0
        %1367 = vmatpush1.msra.mxu0 0.0
        %1368 = vmatprep.subr.mxu0 0.0
        %1369 = vmatpush1.msra.mxu0 0.0
        %1370 = vmatprep.subr.mxu0 0.0
        %1371 = vmatpush1.msra.mxu0 0.0
        %1372 = vmatprep.subr.mxu0 0.0
        %1373 = vmatpush1.msra.mxu0 0.0
        %1374 = vmatprep.subr.mxu0 0.0
        %1375 = vmatpush1.msra.mxu0 0.0
        %1376 = vmatprep.subr.mxu0 0.0
        %1377 = vmatpush1.msra.mxu0 0.0
        %1378 = vmatprep.subr.mxu0 0.0
        %1379 = vmatpush1.msra.mxu0 0.0
        %1380 = vmatprep.subr.mxu0 0.0
        %1381 = vmatpush1.msra.mxu0 %v1351
        %1382 = vmatprep.subr.mxu0 0.0
        %1383 = vmatpush1.msra.mxu0 %v1350
        %1384 = vmatprep.subr.mxu0 0.0
        %1385 = vmatpush1.msra.mxu0 %v1349
        %1386 = vmatprep.subr.mxu0 0.0
        %1387 = vmatpush1.msra.mxu0 %v1348
        %1388 = vmatprep.subr.mxu0 0.0
        %1389 = vmatpush2.msra.mxu0 0.0
        %1390 = vmatprep.subr.mxu0 0.0
        %1391 = vmatpush2.msra.mxu0 0.0
        %1392 = vmatprep.subr.mxu0 0.0
        %1393 = vmatpush2.msra.mxu0 0.0
        %1394 = vmatprep.subr.mxu0 0.0
        %1395 = vmatpush2.msra.mxu0 0.0
        %1396 = vmatprep.subr.mxu0 0.0
        %1397 = vmatpush2.msra.mxu0 0.0
        %1398 = vmatprep.subr.mxu0 0.0
        %1399 = vmatpush2.msra.mxu0 0.0
        %1400 = vmatprep.subr.mxu0 0.0
        %1401 = vmatpush2.msra.mxu0 0.0
        %1402 = vmatprep.subr.mxu0 0.0
        %1403 = vmatpush2.msra.mxu0 0.0
        %1404 = vmatprep.subr.mxu0 0.0
        %1405 = vmatpush2.msra.mxu0 0.0
        %1406 = vmatprep.subr.mxu0 0.0
        %1407 = vmatpush2.msra.mxu0 0.0
        %1408 = vmatprep.subr.mxu0 0.0
        %1409 = vmatpush2.msra.mxu0 0.0
        %1410 = vmatprep.subr.mxu0 0.0
        %1411 = vmatpush2.msra.mxu0 0.0
        %1412 = vmatprep.subr.mxu0 0.0
        %1413 = vmatpush2.msra.mxu0 0.0
        %1414 = vmatprep.subr.mxu0 0.0
        %1415 = vmatpush2.msra.mxu0 0.0
        %1416 = vmatprep.subr.mxu0 0.0
        %1417 = vmatpush2.msra.mxu0 0.0
        %1418 = vmatprep.subr.mxu0 0.0
        %1419 = vmatpush2.msra.mxu0 0.0
        %1420 = vmatprep.mubr.f32.mxu0 0.0
        %1421 = vmatmul.mubr.f32.gmra.mxu0 %v1354
        %v1422 = vpop.f32.mrf.mxu0
        %v1423 = vadd.f32 %v1352, %v1422
        %v1424 = vpop.f32.mrf.mxu0
        %1425 = vdwg.mxu0
        %1426 = vst [vmem:[%s397] sm:$0x1] %v1423
        %s1427 = sand.u32 %s215, 1
        %s1428 = scalar_lea.sflag [#allocation4], %s1427
        %s1429 = sand.u32 %s215, 1
        %s1430 = scalar_lea.vmem [#allocation11], %s1429
        // Predicated region
        $region73: #{tpu_custom_call.1} parent=51 // pred_check
          %p1431 = pneg %p225
        $region74: #{tpu_custom_call.1} parent=51 // pred_check_branch
          %1433 = sbr.rel (%p1431) target = $region76
        $region75: #{tpu_custom_call.1} parent=51 // pred_region
          %s1435 = ssub.s32 16, 16
          %1436 = vsyncadd %s1428, %s1435
          %s1437 = smul.addr %s29, 16
          %s1438 = scalar_lea.hbm %s8, %s1437
          %s1440 = sshll.u32 %s1430, 4
          %s1441 = int_to_ptr.vmem [resolvable:$true] %s1440
          %1443 = dma.vmem_to_hbm [thread:$0]  %s1441, 16, %s1438, %s1428
        $region76: #{tpu_custom_call.1} parent=51 // pred_fallthru
          _
      $region52: #{tpu_custom_call.1} parent=5 // pred_fallthru
        _
      %p1444 = scmp.le.s32.totalorder 2, %s24
      // Predicated region
      $region77: #{tpu_custom_call.1} parent=5 // pred_check
        %p1445 = pneg %p1444
      $region78: #{tpu_custom_call.1} parent=5 // pred_check_branch
        %1447 = sbr.rel (%p1445) target = $region80
      $region79: #{tpu_custom_call.1} parent=5 // pred_region
        %s1448 = ssub.s32 %s24, 2
        // Predicated region
        $region81: #{tpu_custom_call.1} parent=79 // pred_check
          %p1449 = pneg %p231
        $region82: #{tpu_custom_call.1} parent=79 // pred_check_branch
          %1451 = sbr.rel (%p1449) target = $region84
        $region83: #{tpu_custom_call.1} parent=79 // pred_region
          %s1452 = sand.u32 %s216, 1
          %s1453 = scalar_lea.sflag [#allocation4], %s1452
          %s1454 = sand.u32 %s216, 1
          %s1455 = scalar_lea.vmem [#allocation11], %s1454
          %1456 = dma.done %s1453, 16
        $region84: #{tpu_custom_call.1} parent=79 // pred_fallthru
          _
      $region80: #{tpu_custom_call.1} parent=5 // pred_fallthru
        _
    $region6: #{tpu_custom_call.1} parent=1 // loop_footer
      %s28 = sadd.s32 1, %s24
    $region7: #{tpu_custom_call.1} parent=1 // loop_footer_branch
      %23 = sbr.rel target = $region3
    $region8: #{tpu_custom_call.1} parent=1 // loop_exit
      _
    %1457 = vsyncpa [#allocation3], 1
    %s1458 = scalar_lea.sflag [#allocation3], 1
    %1459 = vsyncpa %s1458, 1
    %1460 = vsyncpa [#allocation6], 1
    %s1461 = scalar_lea.sflag [#allocation6], 1
    %1462 = vsyncpa %s1461, 1
    %1463 = vsyncpa [#allocation9], 1
    %1464 = vsyncpa [#allocation4], 1
    %s1465 = scalar_lea.sflag [#allocation4], 1
    %1466 = vsyncpa %s1465, 1

</llo_original>
